<compile_context>
chip_gen: v5e
topology: v5e:2x2
jax: 0.10.0
libtpu: 0.0.40
codegen_flags: <defaults>
</compile_context>

<pallas_src>
import math

import jax
import jax.numpy as jnp
from jax.experimental import pallas as pl
from jax.experimental.pallas import tpu as pltpu

# ---------------------------------------------------------------------------
# Synthetic "BertCNN" config (small shapes; BertModel weights are synthetic)
# ---------------------------------------------------------------------------
BATCH = 2
SEQ = 8
HIDDEN = 32            # config['hidden_size'] = bert.config.hidden_size
NUM_HEADS = 4
HEAD_DIM = HIDDEN // NUM_HEADS
INTERMEDIATE = 64
NUM_LAYERS = 2
VOCAB = 100
VOCAB_PAD = 128        # pad vocab rows to one full lane width for the one-hot gather
MAX_POS = 64
TYPE_VOCAB = 2
KERNEL_SIZE = 3        # config['kernel_size']
PAD = (KERNEL_SIZE - 1) // 2
LN_EPS = 1e-12


# ---------------------------------------------------------------------------
# Shared math (used by both the Pallas kernel and the pure-JAX reference)
# ---------------------------------------------------------------------------
def _layernorm(x, g, b):
    mean = jnp.mean(x, axis=-1, keepdims=True)
    var = jnp.mean((x - mean) ** 2, axis=-1, keepdims=True)
    return (x - mean) * jax.lax.rsqrt(var + LN_EPS) * g + b


def _gelu(x):
    # TODO(synk): HF BERT uses exact erf-GELU; tanh approximation used here.
    c = math.sqrt(2.0 / math.pi)
    return 0.5 * x * (1.0 + jnp.tanh(c * (x + 0.044715 * x * x * x)))


def _softmax_last(s, use_approx_recip):
    s = s - jnp.max(s, axis=-1, keepdims=True)
    p = jnp.exp(s)
    denom = jnp.sum(p, axis=-1, keepdims=True)
    if use_approx_recip:
        return p * pl.reciprocal(denom, approx=True)   # EUP slot — free under the MXU
    return p / denom


def _split_heads(x3):
    """(B, S, H) -> (NH*B, S, D); leading index n = h*B + b (head-major)."""
    return jnp.concatenate(
        [x3[:, :, h * HEAD_DIM:(h + 1) * HEAD_DIM] for h in range(NUM_HEADS)], axis=0)


def _merge_heads(ctx, bsz):
    """(NH*B, S, D) -> (B, S, H) with lanes ordered [head0 | head1 | ...]."""
    return jnp.concatenate(
        [ctx[h * bsz:(h + 1) * bsz] for h in range(NUM_HEADS)], axis=-1)


def _bert_cnn_math(ids, word_emb, pos_type, eg, eb,
                   wqkv, bqkv, wo, bo, ln1g, ln1b,
                   w1, b1, w2, b2, ln2g, ln2b,
                   cnn_wk, *, use_approx_recip, roll_fn):
    f32 = jnp.float32
    seq, hid = pos_type.shape
    n_tok = ids.shape[0]
    bsz = n_tok // seq
    vocab_pad = word_emb.shape[0]

    # Embedding gather as a lane-dense one-hot matmul (pure MXU), + pos/type + LN.
    onehot = (ids == jax.lax.broadcasted_iota(jnp.int32, (n_tok, vocab_pad), 1)).astype(f32)
    x = jnp.dot(onehot, word_emb, preferred_element_type=f32)        # (B*S, H)
    x = (x.reshape(bsz, seq, hid) + pos_type[None]).reshape(n_tok, hid)
    x = _layernorm(x, eg, eb)

    n_layers = wqkv.shape[0]
    for l in range(n_layers):                  # static unroll; weights VMEM-resident
        # Fused QKV projection: (B*S, H) @ (H, 3H).  1/sqrt(D) pre-folded into Wq.
        qkv = jnp.dot(x, wqkv[l], preferred_element_type=f32) + bqkv[l]
        q3 = qkv[:, 0 * hid:1 * hid].reshape(bsz, seq, hid)
        k3 = qkv[:, 1 * hid:2 * hid].reshape(bsz, seq, hid)
        v3 = qkv[:, 2 * hid:3 * hid].reshape(bsz, seq, hid)

        # All heads in ONE batched einsum + ONE softmax (heads ride the batch dim).
        qh, kh, vh = _split_heads(q3), _split_heads(k3), _split_heads(v3)
        sc = jnp.einsum('nqd,nkd->nqk', qh, kh, preferred_element_type=f32)
        p = _softmax_last(sc, use_approx_recip)
        ctx = jnp.einsum('nqk,nkd->nqd', p, vh, preferred_element_type=f32)

        # Single output projection after a cheap 32-lane head concat.
        attn = jnp.dot(_merge_heads(ctx, bsz).reshape(n_tok, hid), wo[l],
                       preferred_element_type=f32) + bo[l]
        x = _layernorm(x + attn, ln1g[l], ln1b[l])            # fused residual + LN

        # Feed-forward with fused bias + GELU epilogue and residual + LN.
        ffn = _gelu(jnp.dot(x, w1[l], preferred_element_type=f32) + b1[l])
        ffn = jnp.dot(ffn, w2[l], preferred_element_type=f32) + b2[l]
        x = _layernorm(x + ffn, ln2g[l], ln2b[l])

    # Conv1d(H, H, K, bias=False, padding=(K-1)//2) over the sequence dim:
    #   out[b,t] = sum_k x[b, t+k-PAD] @ Wk[k]   (zero outside [0, S))
    # = per-tap matmul + sublane roll (XLU) + boundary mask.  Rolling the flat (B*S, H)
    # slab is safe because any row crossing a batch/sequence boundary is masked to zero.
    seq_idx = jax.lax.broadcasted_iota(jnp.int32, (bsz, seq, hid), 1).reshape(n_tok, hid)
    out = jnp.zeros((n_tok, hid), f32)
    n_taps = cnn_wk.shape[0]
    for t in range(n_taps):
        m = t - PAD
        y = jnp.dot(x, cnn_wk[t], preferred_element_type=f32)        # (B*S, H)
        if m != 0:
            y = roll_fn(y, -m)                                        # out[r] = y[r + m]
            valid = jnp.logical_and(seq_idx + m >= 0, seq_idx + m < seq)
            y = jnp.where(valid, y, 0.0)
        out = out + y
    # NOTE: at real shapes, present this store as a lane-dense (B*S*H/128, 128) slab.
    return out.reshape(bsz, seq, hid)


# ---------------------------------------------------------------------------
# The single fused Pallas kernel
# ---------------------------------------------------------------------------
def _bert_cnn_kernel(ids_ref, wemb_ref, pt_ref, eg_ref, eb_ref,
                     wqkv_ref, bqkv_ref, wo_ref, bo_ref,
                     ln1g_ref, ln1b_ref, w1_ref, b1_ref, w2_ref, b2_ref,
                     ln2g_ref, ln2b_ref, cnnw_ref, o_ref):
    def roll_rows(y, shift):   # jnp.roll semantics along axis 0, static shift, XLU slot
        return pltpu.roll(y, shift=shift % y.shape[0], axis=0)

    o_ref[...] = _bert_cnn_math(
        ids_ref[...], wemb_ref[...], pt_ref[...], eg_ref[...], eb_ref[...],
        wqkv_ref[...], bqkv_ref[...], wo_ref[...], bo_ref[...],
        ln1g_ref[...], ln1b_ref[...], w1_ref[...], b1_ref[...],
        w2_ref[...], b2_ref[...], ln2g_ref[...], ln2b_ref[...],
        cnnw_ref[...], use_approx_recip=True, roll_fn=roll_rows)


# ---------------------------------------------------------------------------
# Parameters: synthetic init (PyTorch-like layout) + one-time packing
# ---------------------------------------------------------------------------
def init_params(key):
    # TODO(synk): BertModel.from_pretrained checkpoint loading replaced by synthetic init.
    keys = iter(jax.random.split(key, 32))
    nk = lambda: next(keys)
    dense = lambda k, shape: (0.02 * jax.random.normal(k, shape)).astype(jnp.float32)

    params = {
        "word_emb": dense(nk(), (VOCAB, HIDDEN)),
        "pos_emb": dense(nk(), (MAX_POS, HIDDEN)),
        "type_emb": dense(nk(), (TYPE_VOCAB, HIDDEN)),
        "emb_ln_g": jnp.ones((HIDDEN,), jnp.float32),
        "emb_ln_b": jnp.zeros((HIDDEN,), jnp.float32),
        "layers": [],
    }
    for _ in range(NUM_LAYERS):
        params["layers"].append({
            "wq": dense(nk(), (HIDDEN, HIDDEN)), "bq": jnp.zeros((HIDDEN,), jnp.float32),
            "wk": dense(nk(), (HIDDEN, HIDDEN)), "bk": jnp.zeros((HIDDEN,), jnp.float32),
            "wv": dense(nk(), (HIDDEN, HIDDEN)), "bv": jnp.zeros((HIDDEN,), jnp.float32),
            "wo": dense(nk(), (HIDDEN, HIDDEN)), "bo": jnp.zeros((HIDDEN,), jnp.float32),
            "ln1_g": jnp.ones((HIDDEN,), jnp.float32), "ln1_b": jnp.zeros((HIDDEN,), jnp.float32),
            "w1": dense(nk(), (HIDDEN, INTERMEDIATE)), "b1": jnp.zeros((INTERMEDIATE,), jnp.float32),
            "w2": dense(nk(), (INTERMEDIATE, HIDDEN)), "b2": jnp.zeros((HIDDEN,), jnp.float32),
            "ln2_g": jnp.ones((HIDDEN,), jnp.float32), "ln2_b": jnp.zeros((HIDDEN,), jnp.float32),
        })
    # nn.Conv1d(hidden, hidden, kernel_size, bias=False) weight: (out, in, K)
    params["cnn_w"] = dense(nk(), (HIDDEN, HIDDEN, KERNEL_SIZE))
    return params


def pack_params(params):
    """One-time weight preprocessing (hoisted out of the forward path)."""
    layers = params["layers"]
    row = lambda v: v.reshape(1, -1)
    stack = lambda f: jnp.stack([f(p) for p in layers])
    q_scale = 1.0 / math.sqrt(HEAD_DIM)          # fold attention scale into Wq / bq
    word_emb = jnp.zeros((VOCAB_PAD, HIDDEN), jnp.float32).at[:VOCAB].set(params["word_emb"])
    return {
        "word_emb": word_emb,                                            # (128, H)
        # token_type_ids assumed all-zero (synthetic setup): pre-sum pos + type[0].
        "pos_type": params["pos_emb"] + params["type_emb"][0:1],         # (MAX_POS, H)
        "emb_ln_g": row(params["emb_ln_g"]),
        "emb_ln_b": row(params["emb_ln_b"]),
        "wqkv": stack(lambda p: jnp.concatenate(
            [p["wq"] * q_scale, p["wk"], p["wv"]], axis=1)),             # (L, H, 3H)
        "bqkv": stack(lambda p: row(jnp.concatenate(
            [p["bq"] * q_scale, p["bk"], p["bv"]]))),                    # (L, 1, 3H)
        "wo": stack(lambda p: p["wo"]),
        "bo": stack(lambda p: row(p["bo"])),
        "ln1_g": stack(lambda p: row(p["ln1_g"])),
        "ln1_b": stack(lambda p: row(p["ln1_b"])),
        "w1": stack(lambda p: p["w1"]),
        "b1": stack(lambda p: row(p["b1"])),
        "w2": stack(lambda p: p["w2"]),
        "b2": stack(lambda p: row(p["b2"])),
        "ln2_g": stack(lambda p: row(p["ln2_g"])),
        "ln2_b": stack(lambda p: row(p["ln2_b"])),
        "cnn_wk": jnp.transpose(params["cnn_w"], (2, 1, 0)),             # (K, H_in, H_out)
    }


def _packed_args(packed, ids, pos_type):
    return (ids, packed["word_emb"], pos_type, packed["emb_ln_g"], packed["emb_ln_b"],
            packed["wqkv"], packed["bqkv"], packed["wo"], packed["bo"],
            packed["ln1_g"], packed["ln1_b"], packed["w1"], packed["b1"],
            packed["w2"], packed["b2"], packed["ln2_g"], packed["ln2_b"],
            packed["cnn_wk"])


# ---------------------------------------------------------------------------
# Forward (single pallas_call) and pure-JAX reference
# ---------------------------------------------------------------------------
def bert_cnn_forward(packed, input_ids):
    """BertCNN.forward: x = bert(x)[0]; x = cnn(x) -> [B, S, H] (one fused kernel)."""
    b, s = input_ids.shape
    ids = input_ids.reshape(b * s, 1).astype(jnp.int32)
    args = _packed_args(packed, ids, packed["pos_type"][:s])
    vmem = pl.BlockSpec(memory_space=pltpu.MemorySpace.VMEM)   # everything VMEM-resident
    # NOTE: at real BERT shapes (and especially v7x's 64 MiB VMEM) this would become a
    # grid over the token dim with dimension_semantics=("parallel",) and bf16 MXU
    # operands; at B*S=16, H=32 the single resident launch is the right design.
    return pl.pallas_call(
        _bert_cnn_kernel,
        out_shape=jax.ShapeDtypeStruct((b, s, HIDDEN), jnp.float32),
        in_specs=[vmem] * len(args),
        out_specs=vmem,
    )(*args)


def bert_cnn_reference(packed, input_ids):
    """Pure-JAX reference (identical math; exact softmax division, jnp.roll)."""
    b, s = input_ids.shape
    ids = input_ids.reshape(b * s, 1).astype(jnp.int32)
    args = _packed_args(packed, ids, packed["pos_type"][:s])
    return _bert_cnn_math(*args, use_approx_recip=False,
                          roll_fn=lambda y, sh: jnp.roll(y, shift=sh, axis=0))


if __name__ == "__main__":
    key = jax.random.PRNGKey(0)
    pkey, dkey = jax.random.split(key)
    params = init_params(pkey)
    packed = pack_params(params)          # one-time packing, outside the jitted forward
    input_ids = jax.random.randint(dkey, (BATCH, SEQ), 0, VOCAB, dtype=jnp.int32)

    out = jax.jit(bert_cnn_forward)(packed, input_ids)
    out = jax.block_until_ready(out)

    assert out.shape == (BATCH, SEQ, HIDDEN), out.shape
    assert out.dtype == jnp.float32
    assert bool(jnp.all(jnp.isfinite(out)))

    ref = bert_cnn_reference(packed, input_ids)
    max_err = float(jnp.max(jnp.abs(out - ref)))
    assert bool(jnp.allclose(out, ref, atol=2e-3, rtol=2e-3)), max_err
    print("KERNEL_OK")
</pallas_src>

<mosaic_0001>
module attributes {stable_mosaic.version = 11 : i64} {
  func.func @_bert_cnn_kernel(%arg0: memref<16x1xi32, #tpu.memory_space<vmem>>, %arg1: memref<128x32xf32, #tpu.memory_space<vmem>>, %arg2: memref<8x32xf32, #tpu.memory_space<vmem>>, %arg3: memref<1x32xf32, #tpu.memory_space<vmem>>, %arg4: memref<1x32xf32, #tpu.memory_space<vmem>>, %arg5: memref<2x32x96xf32, #tpu.memory_space<vmem>>, %arg6: memref<2x1x96xf32, #tpu.memory_space<vmem>>, %arg7: memref<2x32x32xf32, #tpu.memory_space<vmem>>, %arg8: memref<2x1x32xf32, #tpu.memory_space<vmem>>, %arg9: memref<2x1x32xf32, #tpu.memory_space<vmem>>, %arg10: memref<2x1x32xf32, #tpu.memory_space<vmem>>, %arg11: memref<2x32x64xf32, #tpu.memory_space<vmem>>, %arg12: memref<2x1x64xf32, #tpu.memory_space<vmem>>, %arg13: memref<2x64x32xf32, #tpu.memory_space<vmem>>, %arg14: memref<2x1x32xf32, #tpu.memory_space<vmem>>, %arg15: memref<2x1x32xf32, #tpu.memory_space<vmem>>, %arg16: memref<2x1x32xf32, #tpu.memory_space<vmem>>, %arg17: memref<3x32x32xf32, #tpu.memory_space<vmem>>, %arg18: memref<2x8x32xf32, #tpu.memory_space<vmem>>) attributes {dimension_semantics = [], scalar_prefetch = 0 : i64, scratch_operands = 0 : i64, tpu.core_type = #tpu.core_type<tc>} {
    %c0 = arith.constant 0 : index
    %c0_0 = arith.constant 0 : index
    %0 = vector.load %arg0[%c0, %c0_0] : memref<16x1xi32, #tpu.memory_space<vmem>>, vector<16x1xi32>
    %c0_1 = arith.constant 0 : index
    %c0_2 = arith.constant 0 : index
    %1 = vector.load %arg1[%c0_1, %c0_2] : memref<128x32xf32, #tpu.memory_space<vmem>>, vector<128x32xf32>
    %c0_3 = arith.constant 0 : index
    %c0_4 = arith.constant 0 : index
    %2 = vector.load %arg2[%c0_3, %c0_4] : memref<8x32xf32, #tpu.memory_space<vmem>>, vector<8x32xf32>
    %c0_5 = arith.constant 0 : index
    %c0_6 = arith.constant 0 : index
    %3 = vector.load %arg3[%c0_5, %c0_6] : memref<1x32xf32, #tpu.memory_space<vmem>>, vector<1x32xf32>
    %c0_7 = arith.constant 0 : index
    %c0_8 = arith.constant 0 : index
    %4 = vector.load %arg4[%c0_7, %c0_8] : memref<1x32xf32, #tpu.memory_space<vmem>>, vector<1x32xf32>
    %c0_9 = arith.constant 0 : index
    %c0_10 = arith.constant 0 : index
    %c0_11 = arith.constant 0 : index
    %5 = vector.load %arg5[%c0_9, %c0_10, %c0_11] : memref<2x32x96xf32, #tpu.memory_space<vmem>>, vector<2x32x96xf32>
    %c0_12 = arith.constant 0 : index
    %c0_13 = arith.constant 0 : index
    %c0_14 = arith.constant 0 : index
    %6 = vector.load %arg6[%c0_12, %c0_13, %c0_14] : memref<2x1x96xf32, #tpu.memory_space<vmem>>, vector<2x1x96xf32>
    %c0_15 = arith.constant 0 : index
    %c0_16 = arith.constant 0 : index
    %c0_17 = arith.constant 0 : index
    %7 = vector.load %arg7[%c0_15, %c0_16, %c0_17] : memref<2x32x32xf32, #tpu.memory_space<vmem>>, vector<2x32x32xf32>
    %c0_18 = arith.constant 0 : index
    %c0_19 = arith.constant 0 : index
    %c0_20 = arith.constant 0 : index
    %8 = vector.load %arg8[%c0_18, %c0_19, %c0_20] : memref<2x1x32xf32, #tpu.memory_space<vmem>>, vector<2x1x32xf32>
    %c0_21 = arith.constant 0 : index
    %c0_22 = arith.constant 0 : index
    %c0_23 = arith.constant 0 : index
    %9 = vector.load %arg9[%c0_21, %c0_22, %c0_23] : memref<2x1x32xf32, #tpu.memory_space<vmem>>, vector<2x1x32xf32>
    %c0_24 = arith.constant 0 : index
    %c0_25 = arith.constant 0 : index
    %c0_26 = arith.constant 0 : index
    %10 = vector.load %arg10[%c0_24, %c0_25, %c0_26] : memref<2x1x32xf32, #tpu.memory_space<vmem>>, vector<2x1x32xf32>
    %c0_27 = arith.constant 0 : index
    %c0_28 = arith.constant 0 : index
    %c0_29 = arith.constant 0 : index
    %11 = vector.load %arg11[%c0_27, %c0_28, %c0_29] : memref<2x32x64xf32, #tpu.memory_space<vmem>>, vector<2x32x64xf32>
    %c0_30 = arith.constant 0 : index
    %c0_31 = arith.constant 0 : index
    %c0_32 = arith.constant 0 : index
    %12 = vector.load %arg12[%c0_30, %c0_31, %c0_32] : memref<2x1x64xf32, #tpu.memory_space<vmem>>, vector<2x1x64xf32>
    %c0_33 = arith.constant 0 : index
    %c0_34 = arith.constant 0 : index
    %c0_35 = arith.constant 0 : index
    %13 = vector.load %arg13[%c0_33, %c0_34, %c0_35] : memref<2x64x32xf32, #tpu.memory_space<vmem>>, vector<2x64x32xf32>
    %c0_36 = arith.constant 0 : index
    %c0_37 = arith.constant 0 : index
    %c0_38 = arith.constant 0 : index
    %14 = vector.load %arg14[%c0_36, %c0_37, %c0_38] : memref<2x1x32xf32, #tpu.memory_space<vmem>>, vector<2x1x32xf32>
    %c0_39 = arith.constant 0 : index
    %c0_40 = arith.constant 0 : index
    %c0_41 = arith.constant 0 : index
    %15 = vector.load %arg15[%c0_39, %c0_40, %c0_41] : memref<2x1x32xf32, #tpu.memory_space<vmem>>, vector<2x1x32xf32>
    %c0_42 = arith.constant 0 : index
    %c0_43 = arith.constant 0 : index
    %c0_44 = arith.constant 0 : index
    %16 = vector.load %arg16[%c0_42, %c0_43, %c0_44] : memref<2x1x32xf32, #tpu.memory_space<vmem>>, vector<2x1x32xf32>
    %c0_45 = arith.constant 0 : index
    %c0_46 = arith.constant 0 : index
    %c0_47 = arith.constant 0 : index
    %17 = vector.load %arg17[%c0_45, %c0_46, %c0_47] : memref<3x32x32xf32, #tpu.memory_space<vmem>>, vector<3x32x32xf32>
    %18 = tpu.iota {dimensions = array<i32: 1>} : vector<16x128xi32>
    %19 = vector.broadcast %0 : vector<16x1xi32> to vector<16x128xi32>
    %20 = arith.cmpi eq, %19, %18 : vector<16x128xi32>
    %21 = arith.extui %20 : vector<16x128xi1> to vector<16x128xi32>
    %22 = arith.sitofp %21 : vector<16x128xi32> to vector<16x128xf32>
    %cst = arith.constant dense<0.000000e+00> : vector<16x32xf32>
    %23 = tpu.matmul %22, %1, %cst {dimension_numbers = #tpu.dot_dimension_numbers<[1], [0], [0], [1], [0, 0, 1, 1], [], []>} : vector<16x128xf32>, vector<128x32xf32>, vector<16x32xf32> -> vector<16x32xf32>
    %24 = vector.shape_cast %23 : vector<16x32xf32> to vector<2x8x32xf32>
    %25 = vector.shape_cast %2 : vector<8x32xf32> to vector<1x8x32xf32>
    %26 = vector.broadcast %25 : vector<1x8x32xf32> to vector<2x8x32xf32>
    %27 = arith.addf %24, %26 : vector<2x8x32xf32>
    %28 = vector.shape_cast %27 : vector<2x8x32xf32> to vector<16x32xf32>
    %cst_48 = arith.constant dense<0.000000e+00> : vector<16xf32>
    %29 = vector.multi_reduction <add>, %28, %cst_48 [1] : vector<16x32xf32> to vector<16xf32>
    %30 = vector.shape_cast %29 : vector<16xf32> to vector<16x1xf32>
    %cst_49 = arith.constant 3.200000e+01 : f32
    %31 = vector.broadcast %cst_49 : f32 to vector<16x1xf32>
    %32 = arith.divf %30, %31 : vector<16x1xf32>
    %33 = vector.broadcast %32 : vector<16x1xf32> to vector<16x32xf32>
    %34 = arith.subf %28, %33 : vector<16x32xf32>
    %35 = arith.mulf %34, %34 : vector<16x32xf32>
    %cst_50 = arith.constant dense<0.000000e+00> : vector<16xf32>
    %36 = vector.multi_reduction <add>, %35, %cst_50 [1] : vector<16x32xf32> to vector<16xf32>
    %37 = vector.shape_cast %36 : vector<16xf32> to vector<16x1xf32>
    %cst_51 = arith.constant 3.200000e+01 : f32
    %38 = vector.broadcast %cst_51 : f32 to vector<16x1xf32>
    %39 = arith.divf %37, %38 : vector<16x1xf32>
    %40 = vector.broadcast %32 : vector<16x1xf32> to vector<16x32xf32>
    %41 = arith.subf %28, %40 : vector<16x32xf32>
    %cst_52 = arith.constant 9.99999996E-13 : f32
    %42 = vector.broadcast %cst_52 : f32 to vector<16x1xf32>
    %43 = arith.addf %39, %42 : vector<16x1xf32>
    %44 = math.rsqrt %43 : vector<16x1xf32>
    %45 = vector.broadcast %44 : vector<16x1xf32> to vector<16x32xf32>
    %46 = arith.mulf %41, %45 : vector<16x32xf32>
    %47 = vector.broadcast %3 : vector<1x32xf32> to vector<16x32xf32>
    %48 = arith.mulf %46, %47 : vector<16x32xf32>
    %49 = vector.broadcast %4 : vector<1x32xf32> to vector<16x32xf32>
    %50 = arith.addf %48, %49 : vector<16x32xf32>
    %51 = vector.extract_strided_slice %5 {offsets = [0, 0, 0], sizes = [1, 32, 96], strides = [1, 1, 1]} : vector<2x32x96xf32> to vector<1x32x96xf32>
    %52 = vector.shape_cast %51 : vector<1x32x96xf32> to vector<32x96xf32>
    %cst_53 = arith.constant dense<0.000000e+00> : vector<16x96xf32>
    %53 = tpu.matmul %50, %52, %cst_53 {dimension_numbers = #tpu.dot_dimension_numbers<[1], [0], [0], [1], [0, 0, 1, 1], [], []>} : vector<16x32xf32>, vector<32x96xf32>, vector<16x96xf32> -> vector<16x96xf32>
    %54 = vector.extract_strided_slice %6 {offsets = [0, 0, 0], sizes = [1, 1, 96], strides = [1, 1, 1]} : vector<2x1x96xf32> to vector<1x1x96xf32>
    %55 = vector.shape_cast %54 : vector<1x1x96xf32> to vector<1x96xf32>
    %56 = vector.broadcast %55 : vector<1x96xf32> to vector<16x96xf32>
    %57 = arith.addf %53, %56 : vector<16x96xf32>
    %58 = vector.extract_strided_slice %57 {offsets = [0, 0], sizes = [16, 32], strides = [1, 1]} : vector<16x96xf32> to vector<16x32xf32>
    %59 = vector.shape_cast %58 : vector<16x32xf32> to vector<2x8x32xf32>
    %60 = vector.extract_strided_slice %57 {offsets = [0, 32], sizes = [16, 32], strides = [1, 1]} : vector<16x96xf32> to vector<16x32xf32>
    %61 = vector.shape_cast %60 : vector<16x32xf32> to vector<2x8x32xf32>
    %62 = vector.extract_strided_slice %57 {offsets = [0, 64], sizes = [16, 32], strides = [1, 1]} : vector<16x96xf32> to vector<16x32xf32>
    %63 = vector.shape_cast %62 : vector<16x32xf32> to vector<2x8x32xf32>
    %64 = vector.extract_strided_slice %59 {offsets = [0, 0, 0], sizes = [2, 8, 8], strides = [1, 1, 1]} : vector<2x8x32xf32> to vector<2x8x8xf32>
    %65 = vector.extract_strided_slice %59 {offsets = [0, 0, 8], sizes = [2, 8, 8], strides = [1, 1, 1]} : vector<2x8x32xf32> to vector<2x8x8xf32>
    %66 = vector.extract_strided_slice %59 {offsets = [0, 0, 16], sizes = [2, 8, 8], strides = [1, 1, 1]} : vector<2x8x32xf32> to vector<2x8x8xf32>
    %67 = vector.extract_strided_slice %59 {offsets = [0, 0, 24], sizes = [2, 8, 8], strides = [1, 1, 1]} : vector<2x8x32xf32> to vector<2x8x8xf32>
    %68 = tpu.concatenate %64, %65, %66, %67 in 0 : vector<2x8x8xf32>, vector<2x8x8xf32>, vector<2x8x8xf32>, vector<2x8x8xf32> -> vector<8x8x8xf32>
    %69 = vector.extract_strided_slice %61 {offsets = [0, 0, 0], sizes = [2, 8, 8], strides = [1, 1, 1]} : vector<2x8x32xf32> to vector<2x8x8xf32>
    %70 = vector.extract_strided_slice %61 {offsets = [0, 0, 8], sizes = [2, 8, 8], strides = [1, 1, 1]} : vector<2x8x32xf32> to vector<2x8x8xf32>
    %71 = vector.extract_strided_slice %61 {offsets = [0, 0, 16], sizes = [2, 8, 8], strides = [1, 1, 1]} : vector<2x8x32xf32> to vector<2x8x8xf32>
    %72 = vector.extract_strided_slice %61 {offsets = [0, 0, 24], sizes = [2, 8, 8], strides = [1, 1, 1]} : vector<2x8x32xf32> to vector<2x8x8xf32>
    %73 = tpu.concatenate %69, %70, %71, %72 in 0 : vector<2x8x8xf32>, vector<2x8x8xf32>, vector<2x8x8xf32>, vector<2x8x8xf32> -> vector<8x8x8xf32>
    %74 = vector.extract_strided_slice %63 {offsets = [0, 0, 0], sizes = [2, 8, 8], strides = [1, 1, 1]} : vector<2x8x32xf32> to vector<2x8x8xf32>
    %75 = vector.extract_strided_slice %63 {offsets = [0, 0, 8], sizes = [2, 8, 8], strides = [1, 1, 1]} : vector<2x8x32xf32> to vector<2x8x8xf32>
    %76 = vector.extract_strided_slice %63 {offsets = [0, 0, 16], sizes = [2, 8, 8], strides = [1, 1, 1]} : vector<2x8x32xf32> to vector<2x8x8xf32>
    %77 = vector.extract_strided_slice %63 {offsets = [0, 0, 24], sizes = [2, 8, 8], strides = [1, 1, 1]} : vector<2x8x32xf32> to vector<2x8x8xf32>
    %78 = tpu.concatenate %74, %75, %76, %77 in 0 : vector<2x8x8xf32>, vector<2x8x8xf32>, vector<2x8x8xf32>, vector<2x8x8xf32> -> vector<8x8x8xf32>
    "tpu.trace_start"() <{level = 10 : i32, message = "nqd,nkd->nqk"}> : () -> ()
    %cst_54 = arith.constant dense<0.000000e+00> : vector<8x8x8xf32>
    %79 = tpu.matmul %68, %73, %cst_54 {dimension_numbers = #tpu.dot_dimension_numbers<[2], [2], [1], [1], [0, 0, 0, 1, 1, 1], [0], [0]>} : vector<8x8x8xf32>, vector<8x8x8xf32>, vector<8x8x8xf32> -> vector<8x8x8xf32>
    "tpu.trace_stop"() : () -> ()
    %cst_55 = arith.constant dense<0xFF800000> : vector<8x8xf32>
    %80 = vector.multi_reduction <maximumf>, %79, %cst_55 [2] : vector<8x8x8xf32> to vector<8x8xf32>
    %81 = vector.shape_cast %80 : vector<8x8xf32> to vector<8x8x1xf32>
    %82 = vector.broadcast %81 : vector<8x8x1xf32> to vector<8x8x8xf32>
    %83 = arith.subf %79, %82 : vector<8x8x8xf32>
    %84 = math.exp %83 : vector<8x8x8xf32>
    %cst_56 = arith.constant dense<0.000000e+00> : vector<8x8xf32>
    %85 = vector.multi_reduction <add>, %84, %cst_56 [2] : vector<8x8x8xf32> to vector<8x8xf32>
    %86 = vector.shape_cast %85 : vector<8x8xf32> to vector<8x8x1xf32>
    %87 = tpu.reciprocal %86 {approx = true} : vector<8x8x1xf32> -> vector<8x8x1xf32>
    %88 = vector.broadcast %87 : vector<8x8x1xf32> to vector<8x8x8xf32>
    %89 = arith.mulf %84, %88 : vector<8x8x8xf32>
    "tpu.trace_start"() <{level = 10 : i32, message = "nqk,nkd->nqd"}> : () -> ()
    %cst_57 = arith.constant dense<0.000000e+00> : vector<8x8x8xf32>
    %90 = tpu.matmul %89, %78, %cst_57 {dimension_numbers = #tpu.dot_dimension_numbers<[2], [1], [1], [2], [0, 0, 0, 1, 1, 2], [0], [0]>} : vector<8x8x8xf32>, vector<8x8x8xf32>, vector<8x8x8xf32> -> vector<8x8x8xf32>
    "tpu.trace_stop"() : () -> ()
    %91 = vector.extract_strided_slice %90 {offsets = [0, 0, 0], sizes = [2, 8, 8], strides = [1, 1, 1]} : vector<8x8x8xf32> to vector<2x8x8xf32>
    %92 = vector.extract_strided_slice %90 {offsets = [2, 0, 0], sizes = [2, 8, 8], strides = [1, 1, 1]} : vector<8x8x8xf32> to vector<2x8x8xf32>
    %93 = vector.extract_strided_slice %90 {offsets = [4, 0, 0], sizes = [2, 8, 8], strides = [1, 1, 1]} : vector<8x8x8xf32> to vector<2x8x8xf32>
    %94 = vector.extract_strided_slice %90 {offsets = [6, 0, 0], sizes = [2, 8, 8], strides = [1, 1, 1]} : vector<8x8x8xf32> to vector<2x8x8xf32>
    %95 = tpu.concatenate %91, %92, %93, %94 in 2 : vector<2x8x8xf32>, vector<2x8x8xf32>, vector<2x8x8xf32>, vector<2x8x8xf32> -> vector<2x8x32xf32>
    %96 = vector.shape_cast %95 : vector<2x8x32xf32> to vector<16x32xf32>
    %97 = vector.extract_strided_slice %7 {offsets = [0, 0, 0], sizes = [1, 32, 32], strides = [1, 1, 1]} : vector<2x32x32xf32> to vector<1x32x32xf32>
    %98 = vector.shape_cast %97 : vector<1x32x32xf32> to vector<32x32xf32>
    %cst_58 = arith.constant dense<0.000000e+00> : vector<16x32xf32>
    %99 = tpu.matmul %96, %98, %cst_58 {dimension_numbers = #tpu.dot_dimension_numbers<[1], [0], [0], [1], [0, 0, 1, 1], [], []>} : vector<16x32xf32>, vector<32x32xf32>, vector<16x32xf32> -> vector<16x32xf32>
    %100 = vector.extract_strided_slice %8 {offsets = [0, 0, 0], sizes = [1, 1, 32], strides = [1, 1, 1]} : vector<2x1x32xf32> to vector<1x1x32xf32>
    %101 = vector.shape_cast %100 : vector<1x1x32xf32> to vector<1x32xf32>
    %102 = vector.broadcast %101 : vector<1x32xf32> to vector<16x32xf32>
    %103 = arith.addf %99, %102 : vector<16x32xf32>
    %104 = arith.addf %50, %103 : vector<16x32xf32>
    %105 = vector.extract_strided_slice %9 {offsets = [0, 0, 0], sizes = [1, 1, 32], strides = [1, 1, 1]} : vector<2x1x32xf32> to vector<1x1x32xf32>
    %106 = vector.shape_cast %105 : vector<1x1x32xf32> to vector<1x32xf32>
    %107 = vector.extract_strided_slice %10 {offsets = [0, 0, 0], sizes = [1, 1, 32], strides = [1, 1, 1]} : vector<2x1x32xf32> to vector<1x1x32xf32>
    %108 = vector.shape_cast %107 : vector<1x1x32xf32> to vector<1x32xf32>
    %cst_59 = arith.constant dense<0.000000e+00> : vector<16xf32>
    %109 = vector.multi_reduction <add>, %104, %cst_59 [1] : vector<16x32xf32> to vector<16xf32>
    %110 = vector.shape_cast %109 : vector<16xf32> to vector<16x1xf32>
    %cst_60 = arith.constant 3.200000e+01 : f32
    %111 = vector.broadcast %cst_60 : f32 to vector<16x1xf32>
    %112 = arith.divf %110, %111 : vector<16x1xf32>
    %113 = vector.broadcast %112 : vector<16x1xf32> to vector<16x32xf32>
    %114 = arith.subf %104, %113 : vector<16x32xf32>
    %115 = arith.mulf %114, %114 : vector<16x32xf32>
    %cst_61 = arith.constant dense<0.000000e+00> : vector<16xf32>
    %116 = vector.multi_reduction <add>, %115, %cst_61 [1] : vector<16x32xf32> to vector<16xf32>
    %117 = vector.shape_cast %116 : vector<16xf32> to vector<16x1xf32>
    %cst_62 = arith.constant 3.200000e+01 : f32
    %118 = vector.broadcast %cst_62 : f32 to vector<16x1xf32>
    %119 = arith.divf %117, %118 : vector<16x1xf32>
    %120 = vector.broadcast %112 : vector<16x1xf32> to vector<16x32xf32>
    %121 = arith.subf %104, %120 : vector<16x32xf32>
    %cst_63 = arith.constant 9.99999996E-13 : f32
    %122 = vector.broadcast %cst_63 : f32 to vector<16x1xf32>
    %123 = arith.addf %119, %122 : vector<16x1xf32>
    %124 = math.rsqrt %123 : vector<16x1xf32>
    %125 = vector.broadcast %124 : vector<16x1xf32> to vector<16x32xf32>
    %126 = arith.mulf %121, %125 : vector<16x32xf32>
    %127 = vector.broadcast %106 : vector<1x32xf32> to vector<16x32xf32>
    %128 = arith.mulf %126, %127 : vector<16x32xf32>
    %129 = vector.broadcast %108 : vector<1x32xf32> to vector<16x32xf32>
    %130 = arith.addf %128, %129 : vector<16x32xf32>
    %131 = vector.extract_strided_slice %11 {offsets = [0, 0, 0], sizes = [1, 32, 64], strides = [1, 1, 1]} : vector<2x32x64xf32> to vector<1x32x64xf32>
    %132 = vector.shape_cast %131 : vector<1x32x64xf32> to vector<32x64xf32>
    %cst_64 = arith.constant dense<0.000000e+00> : vector<16x64xf32>
    %133 = tpu.matmul %130, %132, %cst_64 {dimension_numbers = #tpu.dot_dimension_numbers<[1], [0], [0], [1], [0, 0, 1, 1], [], []>} : vector<16x32xf32>, vector<32x64xf32>, vector<16x64xf32> -> vector<16x64xf32>
    %134 = vector.extract_strided_slice %12 {offsets = [0, 0, 0], sizes = [1, 1, 64], strides = [1, 1, 1]} : vector<2x1x64xf32> to vector<1x1x64xf32>
    %135 = vector.shape_cast %134 : vector<1x1x64xf32> to vector<1x64xf32>
    %136 = vector.broadcast %135 : vector<1x64xf32> to vector<16x64xf32>
    %137 = arith.addf %133, %136 : vector<16x64xf32>
    %cst_65 = arith.constant 5.000000e-01 : f32
    %138 = vector.broadcast %cst_65 : f32 to vector<16x64xf32>
    %139 = arith.mulf %138, %137 : vector<16x64xf32>
    %cst_66 = arith.constant 4.471500e-02 : f32
    %140 = vector.broadcast %cst_66 : f32 to vector<16x64xf32>
    %141 = arith.mulf %140, %137 : vector<16x64xf32>
    %142 = arith.mulf %141, %137 : vector<16x64xf32>
    %143 = arith.mulf %142, %137 : vector<16x64xf32>
    %144 = arith.addf %137, %143 : vector<16x64xf32>
    %cst_67 = arith.constant 0.797884583 : f32
    %145 = vector.broadcast %cst_67 : f32 to vector<16x64xf32>
    %146 = arith.mulf %145, %144 : vector<16x64xf32>
    %147 = math.tanh %146 : vector<16x64xf32>
    %cst_68 = arith.constant 1.000000e+00 : f32
    %148 = vector.broadcast %cst_68 : f32 to vector<16x64xf32>
    %149 = arith.addf %148, %147 : vector<16x64xf32>
    %150 = arith.mulf %139, %149 : vector<16x64xf32>
    %151 = vector.extract_strided_slice %13 {offsets = [0, 0, 0], sizes = [1, 64, 32], strides = [1, 1, 1]} : vector<2x64x32xf32> to vector<1x64x32xf32>
    %152 = vector.shape_cast %151 : vector<1x64x32xf32> to vector<64x32xf32>
    %cst_69 = arith.constant dense<0.000000e+00> : vector<16x32xf32>
    %153 = tpu.matmul %150, %152, %cst_69 {dimension_numbers = #tpu.dot_dimension_numbers<[1], [0], [0], [1], [0, 0, 1, 1], [], []>} : vector<16x64xf32>, vector<64x32xf32>, vector<16x32xf32> -> vector<16x32xf32>
    %154 = vector.extract_strided_slice %14 {offsets = [0, 0, 0], sizes = [1, 1, 32], strides = [1, 1, 1]} : vector<2x1x32xf32> to vector<1x1x32xf32>
    %155 = vector.shape_cast %154 : vector<1x1x32xf32> to vector<1x32xf32>
    %156 = vector.broadcast %155 : vector<1x32xf32> to vector<16x32xf32>
    %157 = arith.addf %153, %156 : vector<16x32xf32>
    %158 = arith.addf %130, %157 : vector<16x32xf32>
    %159 = vector.extract_strided_slice %15 {offsets = [0, 0, 0], sizes = [1, 1, 32], strides = [1, 1, 1]} : vector<2x1x32xf32> to vector<1x1x32xf32>
    %160 = vector.shape_cast %159 : vector<1x1x32xf32> to vector<1x32xf32>
    %161 = vector.extract_strided_slice %16 {offsets = [0, 0, 0], sizes = [1, 1, 32], strides = [1, 1, 1]} : vector<2x1x32xf32> to vector<1x1x32xf32>
    %162 = vector.shape_cast %161 : vector<1x1x32xf32> to vector<1x32xf32>
    %cst_70 = arith.constant dense<0.000000e+00> : vector<16xf32>
    %163 = vector.multi_reduction <add>, %158, %cst_70 [1] : vector<16x32xf32> to vector<16xf32>
    %164 = vector.shape_cast %163 : vector<16xf32> to vector<16x1xf32>
    %cst_71 = arith.constant 3.200000e+01 : f32
    %165 = vector.broadcast %cst_71 : f32 to vector<16x1xf32>
    %166 = arith.divf %164, %165 : vector<16x1xf32>
    %167 = vector.broadcast %166 : vector<16x1xf32> to vector<16x32xf32>
    %168 = arith.subf %158, %167 : vector<16x32xf32>
    %169 = arith.mulf %168, %168 : vector<16x32xf32>
    %cst_72 = arith.constant dense<0.000000e+00> : vector<16xf32>
    %170 = vector.multi_reduction <add>, %169, %cst_72 [1] : vector<16x32xf32> to vector<16xf32>
    %171 = vector.shape_cast %170 : vector<16xf32> to vector<16x1xf32>
    %cst_73 = arith.constant 3.200000e+01 : f32
    %172 = vector.broadcast %cst_73 : f32 to vector<16x1xf32>
    %173 = arith.divf %171, %172 : vector<16x1xf32>
    %174 = vector.broadcast %166 : vector<16x1xf32> to vector<16x32xf32>
    %175 = arith.subf %158, %174 : vector<16x32xf32>
    %cst_74 = arith.constant 9.99999996E-13 : f32
    %176 = vector.broadcast %cst_74 : f32 to vector<16x1xf32>
    %177 = arith.addf %173, %176 : vector<16x1xf32>
    %178 = math.rsqrt %177 : vector<16x1xf32>
    %179 = vector.broadcast %178 : vector<16x1xf32> to vector<16x32xf32>
    %180 = arith.mulf %175, %179 : vector<16x32xf32>
    %181 = vector.broadcast %160 : vector<1x32xf32> to vector<16x32xf32>
    %182 = arith.mulf %180, %181 : vector<16x32xf32>
    %183 = vector.broadcast %162 : vector<1x32xf32> to vector<16x32xf32>
    %184 = arith.addf %182, %183 : vector<16x32xf32>
    %185 = vector.extract_strided_slice %5 {offsets = [1, 0, 0], sizes = [1, 32, 96], strides = [1, 1, 1]} : vector<2x32x96xf32> to vector<1x32x96xf32>
    %186 = vector.shape_cast %185 : vector<1x32x96xf32> to vector<32x96xf32>
    %cst_75 = arith.constant dense<0.000000e+00> : vector<16x96xf32>
    %187 = tpu.matmul %184, %186, %cst_75 {dimension_numbers = #tpu.dot_dimension_numbers<[1], [0], [0], [1], [0, 0, 1, 1], [], []>} : vector<16x32xf32>, vector<32x96xf32>, vector<16x96xf32> -> vector<16x96xf32>
    %188 = vector.extract_strided_slice %6 {offsets = [1, 0, 0], sizes = [1, 1, 96], strides = [1, 1, 1]} : vector<2x1x96xf32> to vector<1x1x96xf32>
    %189 = vector.shape_cast %188 : vector<1x1x96xf32> to vector<1x96xf32>
    %190 = vector.broadcast %189 : vector<1x96xf32> to vector<16x96xf32>
    %191 = arith.addf %187, %190 : vector<16x96xf32>
    %192 = vector.extract_strided_slice %191 {offsets = [0, 0], sizes = [16, 32], strides = [1, 1]} : vector<16x96xf32> to vector<16x32xf32>
    %193 = vector.shape_cast %192 : vector<16x32xf32> to vector<2x8x32xf32>
    %194 = vector.extract_strided_slice %191 {offsets = [0, 32], sizes = [16, 32], strides = [1, 1]} : vector<16x96xf32> to vector<16x32xf32>
    %195 = vector.shape_cast %194 : vector<16x32xf32> to vector<2x8x32xf32>
    %196 = vector.extract_strided_slice %191 {offsets = [0, 64], sizes = [16, 32], strides = [1, 1]} : vector<16x96xf32> to vector<16x32xf32>
    %197 = vector.shape_cast %196 : vector<16x32xf32> to vector<2x8x32xf32>
    %198 = vector.extract_strided_slice %193 {offsets = [0, 0, 0], sizes = [2, 8, 8], strides = [1, 1, 1]} : vector<2x8x32xf32> to vector<2x8x8xf32>
    %199 = vector.extract_strided_slice %193 {offsets = [0, 0, 8], sizes = [2, 8, 8], strides = [1, 1, 1]} : vector<2x8x32xf32> to vector<2x8x8xf32>
    %200 = vector.extract_strided_slice %193 {offsets = [0, 0, 16], sizes = [2, 8, 8], strides = [1, 1, 1]} : vector<2x8x32xf32> to vector<2x8x8xf32>
    %201 = vector.extract_strided_slice %193 {offsets = [0, 0, 24], sizes = [2, 8, 8], strides = [1, 1, 1]} : vector<2x8x32xf32> to vector<2x8x8xf32>
    %202 = tpu.concatenate %198, %199, %200, %201 in 0 : vector<2x8x8xf32>, vector<2x8x8xf32>, vector<2x8x8xf32>, vector<2x8x8xf32> -> vector<8x8x8xf32>
    %203 = vector.extract_strided_slice %195 {offsets = [0, 0, 0], sizes = [2, 8, 8], strides = [1, 1, 1]} : vector<2x8x32xf32> to vector<2x8x8xf32>
    %204 = vector.extract_strided_slice %195 {offsets = [0, 0, 8], sizes = [2, 8, 8], strides = [1, 1, 1]} : vector<2x8x32xf32> to vector<2x8x8xf32>
    %205 = vector.extract_strided_slice %195 {offsets = [0, 0, 16], sizes = [2, 8, 8], strides = [1, 1, 1]} : vector<2x8x32xf32> to vector<2x8x8xf32>
    %206 = vector.extract_strided_slice %195 {offsets = [0, 0, 24], sizes = [2, 8, 8], strides = [1, 1, 1]} : vector<2x8x32xf32> to vector<2x8x8xf32>
    %207 = tpu.concatenate %203, %204, %205, %206 in 0 : vector<2x8x8xf32>, vector<2x8x8xf32>, vector<2x8x8xf32>, vector<2x8x8xf32> -> vector<8x8x8xf32>
    %208 = vector.extract_strided_slice %197 {offsets = [0, 0, 0], sizes = [2, 8, 8], strides = [1, 1, 1]} : vector<2x8x32xf32> to vector<2x8x8xf32>
    %209 = vector.extract_strided_slice %197 {offsets = [0, 0, 8], sizes = [2, 8, 8], strides = [1, 1, 1]} : vector<2x8x32xf32> to vector<2x8x8xf32>
    %210 = vector.extract_strided_slice %197 {offsets = [0, 0, 16], sizes = [2, 8, 8], strides = [1, 1, 1]} : vector<2x8x32xf32> to vector<2x8x8xf32>
    %211 = vector.extract_strided_slice %197 {offsets = [0, 0, 24], sizes = [2, 8, 8], strides = [1, 1, 1]} : vector<2x8x32xf32> to vector<2x8x8xf32>
    %212 = tpu.concatenate %208, %209, %210, %211 in 0 : vector<2x8x8xf32>, vector<2x8x8xf32>, vector<2x8x8xf32>, vector<2x8x8xf32> -> vector<8x8x8xf32>
    "tpu.trace_start"() <{level = 10 : i32, message = "nqd,nkd->nqk"}> : () -> ()
    %cst_76 = arith.constant dense<0.000000e+00> : vector<8x8x8xf32>
    %213 = tpu.matmul %202, %207, %cst_76 {dimension_numbers = #tpu.dot_dimension_numbers<[2], [2], [1], [1], [0, 0, 0, 1, 1, 1], [0], [0]>} : vector<8x8x8xf32>, vector<8x8x8xf32>, vector<8x8x8xf32> -> vector<8x8x8xf32>
    "tpu.trace_stop"() : () -> ()
    %cst_77 = arith.constant dense<0xFF800000> : vector<8x8xf32>
    %214 = vector.multi_reduction <maximumf>, %213, %cst_77 [2] : vector<8x8x8xf32> to vector<8x8xf32>
    %215 = vector.shape_cast %214 : vector<8x8xf32> to vector<8x8x1xf32>
    %216 = vector.broadcast %215 : vector<8x8x1xf32> to vector<8x8x8xf32>
    %217 = arith.subf %213, %216 : vector<8x8x8xf32>
    %218 = math.exp %217 : vector<8x8x8xf32>
    %cst_78 = arith.constant dense<0.000000e+00> : vector<8x8xf32>
    %219 = vector.multi_reduction <add>, %218, %cst_78 [2] : vector<8x8x8xf32> to vector<8x8xf32>
    %220 = vector.shape_cast %219 : vector<8x8xf32> to vector<8x8x1xf32>
    %221 = tpu.reciprocal %220 {approx = true} : vector<8x8x1xf32> -> vector<8x8x1xf32>
    %222 = vector.broadcast %221 : vector<8x8x1xf32> to vector<8x8x8xf32>
    %223 = arith.mulf %218, %222 : vector<8x8x8xf32>
    "tpu.trace_start"() <{level = 10 : i32, message = "nqk,nkd->nqd"}> : () -> ()
    %cst_79 = arith.constant dense<0.000000e+00> : vector<8x8x8xf32>
    %224 = tpu.matmul %223, %212, %cst_79 {dimension_numbers = #tpu.dot_dimension_numbers<[2], [1], [1], [2], [0, 0, 0, 1, 1, 2], [0], [0]>} : vector<8x8x8xf32>, vector<8x8x8xf32>, vector<8x8x8xf32> -> vector<8x8x8xf32>
    "tpu.trace_stop"() : () -> ()
    %225 = vector.extract_strided_slice %224 {offsets = [0, 0, 0], sizes = [2, 8, 8], strides = [1, 1, 1]} : vector<8x8x8xf32> to vector<2x8x8xf32>
    %226 = vector.extract_strided_slice %224 {offsets = [2, 0, 0], sizes = [2, 8, 8], strides = [1, 1, 1]} : vector<8x8x8xf32> to vector<2x8x8xf32>
    %227 = vector.extract_strided_slice %224 {offsets = [4, 0, 0], sizes = [2, 8, 8], strides = [1, 1, 1]} : vector<8x8x8xf32> to vector<2x8x8xf32>
    %228 = vector.extract_strided_slice %224 {offsets = [6, 0, 0], sizes = [2, 8, 8], strides = [1, 1, 1]} : vector<8x8x8xf32> to vector<2x8x8xf32>
    %229 = tpu.concatenate %225, %226, %227, %228 in 2 : vector<2x8x8xf32>, vector<2x8x8xf32>, vector<2x8x8xf32>, vector<2x8x8xf32> -> vector<2x8x32xf32>
    %230 = vector.shape_cast %229 : vector<2x8x32xf32> to vector<16x32xf32>
    %231 = vector.extract_strided_slice %7 {offsets = [1, 0, 0], sizes = [1, 32, 32], strides = [1, 1, 1]} : vector<2x32x32xf32> to vector<1x32x32xf32>
    %232 = vector.shape_cast %231 : vector<1x32x32xf32> to vector<32x32xf32>
    %cst_80 = arith.constant dense<0.000000e+00> : vector<16x32xf32>
    %233 = tpu.matmul %230, %232, %cst_80 {dimension_numbers = #tpu.dot_dimension_numbers<[1], [0], [0], [1], [0, 0, 1, 1], [], []>} : vector<16x32xf32>, vector<32x32xf32>, vector<16x32xf32> -> vector<16x32xf32>
    %234 = vector.extract_strided_slice %8 {offsets = [1, 0, 0], sizes = [1, 1, 32], strides = [1, 1, 1]} : vector<2x1x32xf32> to vector<1x1x32xf32>
    %235 = vector.shape_cast %234 : vector<1x1x32xf32> to vector<1x32xf32>
    %236 = vector.broadcast %235 : vector<1x32xf32> to vector<16x32xf32>
    %237 = arith.addf %233, %236 : vector<16x32xf32>
    %238 = arith.addf %184, %237 : vector<16x32xf32>
    %239 = vector.extract_strided_slice %9 {offsets = [1, 0, 0], sizes = [1, 1, 32], strides = [1, 1, 1]} : vector<2x1x32xf32> to vector<1x1x32xf32>
    %240 = vector.shape_cast %239 : vector<1x1x32xf32> to vector<1x32xf32>
    %241 = vector.extract_strided_slice %10 {offsets = [1, 0, 0], sizes = [1, 1, 32], strides = [1, 1, 1]} : vector<2x1x32xf32> to vector<1x1x32xf32>
    %242 = vector.shape_cast %241 : vector<1x1x32xf32> to vector<1x32xf32>
    %cst_81 = arith.constant dense<0.000000e+00> : vector<16xf32>
    %243 = vector.multi_reduction <add>, %238, %cst_81 [1] : vector<16x32xf32> to vector<16xf32>
    %244 = vector.shape_cast %243 : vector<16xf32> to vector<16x1xf32>
    %cst_82 = arith.constant 3.200000e+01 : f32
    %245 = vector.broadcast %cst_82 : f32 to vector<16x1xf32>
    %246 = arith.divf %244, %245 : vector<16x1xf32>
    %247 = vector.broadcast %246 : vector<16x1xf32> to vector<16x32xf32>
    %248 = arith.subf %238, %247 : vector<16x32xf32>
    %249 = arith.mulf %248, %248 : vector<16x32xf32>
    %cst_83 = arith.constant dense<0.000000e+00> : vector<16xf32>
    %250 = vector.multi_reduction <add>, %249, %cst_83 [1] : vector<16x32xf32> to vector<16xf32>
    %251 = vector.shape_cast %250 : vector<16xf32> to vector<16x1xf32>
    %cst_84 = arith.constant 3.200000e+01 : f32
    %252 = vector.broadcast %cst_84 : f32 to vector<16x1xf32>
    %253 = arith.divf %251, %252 : vector<16x1xf32>
    %254 = vector.broadcast %246 : vector<16x1xf32> to vector<16x32xf32>
    %255 = arith.subf %238, %254 : vector<16x32xf32>
    %cst_85 = arith.constant 9.99999996E-13 : f32
    %256 = vector.broadcast %cst_85 : f32 to vector<16x1xf32>
    %257 = arith.addf %253, %256 : vector<16x1xf32>
    %258 = math.rsqrt %257 : vector<16x1xf32>
    %259 = vector.broadcast %258 : vector<16x1xf32> to vector<16x32xf32>
    %260 = arith.mulf %255, %259 : vector<16x32xf32>
    %261 = vector.broadcast %240 : vector<1x32xf32> to vector<16x32xf32>
    %262 = arith.mulf %260, %261 : vector<16x32xf32>
    %263 = vector.broadcast %242 : vector<1x32xf32> to vector<16x32xf32>
    %264 = arith.addf %262, %263 : vector<16x32xf32>
    %265 = vector.extract_strided_slice %11 {offsets = [1, 0, 0], sizes = [1, 32, 64], strides = [1, 1, 1]} : vector<2x32x64xf32> to vector<1x32x64xf32>
    %266 = vector.shape_cast %265 : vector<1x32x64xf32> to vector<32x64xf32>
    %cst_86 = arith.constant dense<0.000000e+00> : vector<16x64xf32>
    %267 = tpu.matmul %264, %266, %cst_86 {dimension_numbers = #tpu.dot_dimension_numbers<[1], [0], [0], [1], [0, 0, 1, 1], [], []>} : vector<16x32xf32>, vector<32x64xf32>, vector<16x64xf32> -> vector<16x64xf32>
    %268 = vector.extract_strided_slice %12 {offsets = [1, 0, 0], sizes = [1, 1, 64], strides = [1, 1, 1]} : vector<2x1x64xf32> to vector<1x1x64xf32>
    %269 = vector.shape_cast %268 : vector<1x1x64xf32> to vector<1x64xf32>
    %270 = vector.broadcast %269 : vector<1x64xf32> to vector<16x64xf32>
    %271 = arith.addf %267, %270 : vector<16x64xf32>
    %cst_87 = arith.constant 5.000000e-01 : f32
    %272 = vector.broadcast %cst_87 : f32 to vector<16x64xf32>
    %273 = arith.mulf %272, %271 : vector<16x64xf32>
    %cst_88 = arith.constant 4.471500e-02 : f32
    %274 = vector.broadcast %cst_88 : f32 to vector<16x64xf32>
    %275 = arith.mulf %274, %271 : vector<16x64xf32>
    %276 = arith.mulf %275, %271 : vector<16x64xf32>
    %277 = arith.mulf %276, %271 : vector<16x64xf32>
    %278 = arith.addf %271, %277 : vector<16x64xf32>
    %cst_89 = arith.constant 0.797884583 : f32
    %279 = vector.broadcast %cst_89 : f32 to vector<16x64xf32>
    %280 = arith.mulf %279, %278 : vector<16x64xf32>
    %281 = math.tanh %280 : vector<16x64xf32>
    %cst_90 = arith.constant 1.000000e+00 : f32
    %282 = vector.broadcast %cst_90 : f32 to vector<16x64xf32>
    %283 = arith.addf %282, %281 : vector<16x64xf32>
    %284 = arith.mulf %273, %283 : vector<16x64xf32>
    %285 = vector.extract_strided_slice %13 {offsets = [1, 0, 0], sizes = [1, 64, 32], strides = [1, 1, 1]} : vector<2x64x32xf32> to vector<1x64x32xf32>
    %286 = vector.shape_cast %285 : vector<1x64x32xf32> to vector<64x32xf32>
    %cst_91 = arith.constant dense<0.000000e+00> : vector<16x32xf32>
    %287 = tpu.matmul %284, %286, %cst_91 {dimension_numbers = #tpu.dot_dimension_numbers<[1], [0], [0], [1], [0, 0, 1, 1], [], []>} : vector<16x64xf32>, vector<64x32xf32>, vector<16x32xf32> -> vector<16x32xf32>
    %288 = vector.extract_strided_slice %14 {offsets = [1, 0, 0], sizes = [1, 1, 32], strides = [1, 1, 1]} : vector<2x1x32xf32> to vector<1x1x32xf32>
    %289 = vector.shape_cast %288 : vector<1x1x32xf32> to vector<1x32xf32>
    %290 = vector.broadcast %289 : vector<1x32xf32> to vector<16x32xf32>
    %291 = arith.addf %287, %290 : vector<16x32xf32>
    %292 = arith.addf %264, %291 : vector<16x32xf32>
    %293 = vector.extract_strided_slice %15 {offsets = [1, 0, 0], sizes = [1, 1, 32], strides = [1, 1, 1]} : vector<2x1x32xf32> to vector<1x1x32xf32>
    %294 = vector.shape_cast %293 : vector<1x1x32xf32> to vector<1x32xf32>
    %295 = vector.extract_strided_slice %16 {offsets = [1, 0, 0], sizes = [1, 1, 32], strides = [1, 1, 1]} : vector<2x1x32xf32> to vector<1x1x32xf32>
    %296 = vector.shape_cast %295 : vector<1x1x32xf32> to vector<1x32xf32>
    %cst_92 = arith.constant dense<0.000000e+00> : vector<16xf32>
    %297 = vector.multi_reduction <add>, %292, %cst_92 [1] : vector<16x32xf32> to vector<16xf32>
    %298 = vector.shape_cast %297 : vector<16xf32> to vector<16x1xf32>
    %cst_93 = arith.constant 3.200000e+01 : f32
    %299 = vector.broadcast %cst_93 : f32 to vector<16x1xf32>
    %300 = arith.divf %298, %299 : vector<16x1xf32>
    %301 = vector.broadcast %300 : vector<16x1xf32> to vector<16x32xf32>
    %302 = arith.subf %292, %301 : vector<16x32xf32>
    %303 = arith.mulf %302, %302 : vector<16x32xf32>
    %cst_94 = arith.constant dense<0.000000e+00> : vector<16xf32>
    %304 = vector.multi_reduction <add>, %303, %cst_94 [1] : vector<16x32xf32> to vector<16xf32>
    %305 = vector.shape_cast %304 : vector<16xf32> to vector<16x1xf32>
    %cst_95 = arith.constant 3.200000e+01 : f32
    %306 = vector.broadcast %cst_95 : f32 to vector<16x1xf32>
    %307 = arith.divf %305, %306 : vector<16x1xf32>
    %308 = vector.broadcast %300 : vector<16x1xf32> to vector<16x32xf32>
    %309 = arith.subf %292, %308 : vector<16x32xf32>
    %cst_96 = arith.constant 9.99999996E-13 : f32
    %310 = vector.broadcast %cst_96 : f32 to vector<16x1xf32>
    %311 = arith.addf %307, %310 : vector<16x1xf32>
    %312 = math.rsqrt %311 : vector<16x1xf32>
    %313 = vector.broadcast %312 : vector<16x1xf32> to vector<16x32xf32>
    %314 = arith.mulf %309, %313 : vector<16x32xf32>
    %315 = vector.broadcast %294 : vector<1x32xf32> to vector<16x32xf32>
    %316 = arith.mulf %314, %315 : vector<16x32xf32>
    %317 = vector.broadcast %296 : vector<1x32xf32> to vector<16x32xf32>
    %318 = arith.addf %316, %317 : vector<16x32xf32>
    %319 = tpu.iota {dimensions = array<i32: 1>} : vector<2x8x32xi32>
    %320 = vector.shape_cast %319 : vector<2x8x32xi32> to vector<16x32xi32>
    %cst_97 = arith.constant 0.000000e+00 : f32
    %321 = vector.broadcast %cst_97 : f32 to vector<16x32xf32>
    %322 = vector.extract_strided_slice %17 {offsets = [0, 0, 0], sizes = [1, 32, 32], strides = [1, 1, 1]} : vector<3x32x32xf32> to vector<1x32x32xf32>
    %323 = vector.shape_cast %322 : vector<1x32x32xf32> to vector<32x32xf32>
    %cst_98 = arith.constant dense<0.000000e+00> : vector<16x32xf32>
    %324 = tpu.matmul %318, %323, %cst_98 {dimension_numbers = #tpu.dot_dimension_numbers<[1], [0], [0], [1], [0, 0, 1, 1], [], []>} : vector<16x32xf32>, vector<32x32xf32>, vector<16x32xf32> -> vector<16x32xf32>
    %c1_i32 = arith.constant 1 : i32
    %325 = tpu.dynamic_rotate %324 by %c1_i32 dim 0 : vector<16x32xf32>, i32 -> vector<16x32xf32>
    %c-1_i32 = arith.constant -1 : i32
    %326 = vector.broadcast %c-1_i32 : i32 to vector<16x32xi32>
    %327 = arith.addi %320, %326 : vector<16x32xi32>
    %c0_i32 = arith.constant 0 : i32
    %328 = vector.broadcast %c0_i32 : i32 to vector<16x32xi32>
    %329 = arith.cmpi sge, %327, %328 : vector<16x32xi32>
    %c-1_i32_99 = arith.constant -1 : i32
    %330 = vector.broadcast %c-1_i32_99 : i32 to vector<16x32xi32>
    %331 = arith.addi %320, %330 : vector<16x32xi32>
    %c8_i32 = arith.constant 8 : i32
    %332 = vector.broadcast %c8_i32 : i32 to vector<16x32xi32>
    %333 = arith.cmpi slt, %331, %332 : vector<16x32xi32>
    %334 = arith.andi %329, %333 : vector<16x32xi1>
    %cst_100 = arith.constant 0.000000e+00 : f32
    %335 = vector.broadcast %cst_100 : f32 to vector<16x32xf32>
    %336 = arith.select %334, %325, %335 : vector<16x32xi1>, vector<16x32xf32>
    %337 = arith.addf %321, %336 : vector<16x32xf32>
    %338 = vector.extract_strided_slice %17 {offsets = [1, 0, 0], sizes = [1, 32, 32], strides = [1, 1, 1]} : vector<3x32x32xf32> to vector<1x32x32xf32>
    %339 = vector.shape_cast %338 : vector<1x32x32xf32> to vector<32x32xf32>
    %cst_101 = arith.constant dense<0.000000e+00> : vector<16x32xf32>
    %340 = tpu.matmul %318, %339, %cst_101 {dimension_numbers = #tpu.dot_dimension_numbers<[1], [0], [0], [1], [0, 0, 1, 1], [], []>} : vector<16x32xf32>, vector<32x32xf32>, vector<16x32xf32> -> vector<16x32xf32>
    %341 = arith.addf %337, %340 : vector<16x32xf32>
    %342 = vector.extract_strided_slice %17 {offsets = [2, 0, 0], sizes = [1, 32, 32], strides = [1, 1, 1]} : vector<3x32x32xf32> to vector<1x32x32xf32>
    %343 = vector.shape_cast %342 : vector<1x32x32xf32> to vector<32x32xf32>
    %cst_102 = arith.constant dense<0.000000e+00> : vector<16x32xf32>
    %344 = tpu.matmul %318, %343, %cst_102 {dimension_numbers = #tpu.dot_dimension_numbers<[1], [0], [0], [1], [0, 0, 1, 1], [], []>} : vector<16x32xf32>, vector<32x32xf32>, vector<16x32xf32> -> vector<16x32xf32>
    %c15_i32 = arith.constant 15 : i32
    %345 = tpu.dynamic_rotate %344 by %c15_i32 dim 0 : vector<16x32xf32>, i32 -> vector<16x32xf32>
    %c1_i32_103 = arith.constant 1 : i32
    %346 = vector.broadcast %c1_i32_103 : i32 to vector<16x32xi32>
    %347 = arith.addi %320, %346 : vector<16x32xi32>
    %c0_i32_104 = arith.constant 0 : i32
    %348 = vector.broadcast %c0_i32_104 : i32 to vector<16x32xi32>
    %349 = arith.cmpi sge, %347, %348 : vector<16x32xi32>
    %c1_i32_105 = arith.constant 1 : i32
    %350 = vector.broadcast %c1_i32_105 : i32 to vector<16x32xi32>
    %351 = arith.addi %320, %350 : vector<16x32xi32>
    %c8_i32_106 = arith.constant 8 : i32
    %352 = vector.broadcast %c8_i32_106 : i32 to vector<16x32xi32>
    %353 = arith.cmpi slt, %351, %352 : vector<16x32xi32>
    %354 = arith.andi %349, %353 : vector<16x32xi1>
    %cst_107 = arith.constant 0.000000e+00 : f32
    %355 = vector.broadcast %cst_107 : f32 to vector<16x32xf32>
    %356 = arith.select %354, %345, %355 : vector<16x32xi1>, vector<16x32xf32>
    %357 = arith.addf %341, %356 : vector<16x32xf32>
    %358 = vector.shape_cast %357 : vector<16x32xf32> to vector<2x8x32xf32>
    %c0_108 = arith.constant 0 : index
    %c0_109 = arith.constant 0 : index
    %c0_110 = arith.constant 0 : index
    %359 = vector.load %arg18[%c0_108, %c0_109, %c0_110] : memref<2x8x32xf32, #tpu.memory_space<vmem>>, vector<2x8x32xf32>
    tpu.vector_store %arg18[%c0_108, %c0_109, %c0_110], %358 {strides = array<i32>} : memref<2x8x32xf32, #tpu.memory_space<vmem>>, vector<2x8x32xf32>,
    return
  }
}

</mosaic_0001>

<llo_original>
// kernel: bert_cnn_forward.1
$region0: #{bert_cnn_forward.1}
  #allocation0 [shape = 'u32[]', space=smem, size = 0x4, offset = 0x4, fixed_abs, tag = 'smem constant byte address 0x4 - core index']
  #allocation1 [shape = 'u32[72,128]{1,0:T(1,128)}', space=vmem, size = 0x9000, scoped, tag = 'internal scratch']
  %s0 = inlined_call_operand.vmem [shape: s32[16,1], index: 0, kind: input, shape index: {}]
  %s1 = inlined_call_operand.vmem [shape: f32[128,32], index: 1, kind: input, shape index: {}]
  %s2 = inlined_call_operand.vmem [shape: f32[8,32], index: 2, kind: input, shape index: {}]
  %s3 = inlined_call_operand.vmem [shape: f32[1,32], index: 3, kind: input, shape index: {}]
  %s4 = inlined_call_operand.vmem [shape: f32[1,32], index: 4, kind: input, shape index: {}]
  %s5 = inlined_call_operand.vmem [shape: f32[2,32,96], index: 5, kind: input, shape index: {}]
  %s6 = inlined_call_operand.vmem [shape: f32[2,1,96], index: 6, kind: input, shape index: {}]
  %s7 = inlined_call_operand.vmem [shape: f32[2,32,32], index: 7, kind: input, shape index: {}]
  %s8 = inlined_call_operand.vmem [shape: f32[2,1,32], index: 8, kind: input, shape index: {}]
  %s9 = inlined_call_operand.vmem [shape: f32[2,1,32], index: 9, kind: input, shape index: {}]
  %s10 = inlined_call_operand.vmem [shape: f32[2,1,32], index: 10, kind: input, shape index: {}]
  %s11 = inlined_call_operand.vmem [shape: f32[2,32,64], index: 11, kind: input, shape index: {}]
  %s12 = inlined_call_operand.vmem [shape: f32[2,1,64], index: 12, kind: input, shape index: {}]
  %s13 = inlined_call_operand.vmem [shape: f32[2,64,32], index: 13, kind: input, shape index: {}]
  %s14 = inlined_call_operand.vmem [shape: f32[2,1,32], index: 14, kind: input, shape index: {}]
  %s15 = inlined_call_operand.vmem [shape: f32[2,1,32], index: 15, kind: input, shape index: {}]
  %s16 = inlined_call_operand.vmem [shape: f32[2,1,32], index: 16, kind: input, shape index: {}]
  %s17 = inlined_call_operand.vmem [shape: f32[3,32,32], index: 17, kind: input, shape index: {}]
  %s18 = inlined_call_operand.hbm [shape: f32[2,8,32], index: 18, kind: output, shape index: {}]
  %s19 = sld [smem:[#allocation0]]
  $region82: #{bert_cnn_forward.1} parent=0
    _
  %s21 = ssub.s32 1, %s19
  %s22 = scalar_select 0, %s21, %s19
  $region1: #{bert_cnn_forward.1} parent=0
    #allocation2 [shape = 'u8[8192]{0}', space=vmem, size = 0x2000, scoped, tag = 'output window, operand 0, single buffered']
    #allocation3 [shape = 's32[1]{0}', space=sflag, size = 0x4, scoped, tag = 'scoped memory for bert_cnn_forward.1']
    %23 = vsyncpa [#allocation3], 0
    // Predicated region
    $region2: #{bert_cnn_forward.1} parent=1 // pred_check
      _
    $region3: #{bert_cnn_forward.1} parent=1 // pred_check_branch
      %25 = sbr.rel (0) target = $region5
    $region4: #{bert_cnn_forward.1} parent=1 // pred_region
      _
    $region5: #{bert_cnn_forward.1} parent=1 // pred_fallthru
      _
    // Predicated region
    $region6: #{bert_cnn_forward.1} parent=1 // pred_check
      _
    $region7: #{bert_cnn_forward.1} parent=1 // pred_check_branch
      %27 = sbr.rel (0) target = $region9
    $region8: #{bert_cnn_forward.1} parent=1 // pred_region
      _
    $region9: #{bert_cnn_forward.1} parent=1 // pred_fallthru
      _
    // Predicated region
    $region10: #{bert_cnn_forward.1} parent=1 // pred_check
      _
    $region11: #{bert_cnn_forward.1} parent=1 // pred_check_branch
      %29 = sbr.rel (0) target = $region13
    $region12: #{bert_cnn_forward.1} parent=1 // pred_region
      _
    $region13: #{bert_cnn_forward.1} parent=1 // pred_fallthru
      _
    // Predicated region
    $region14: #{bert_cnn_forward.1} parent=1 // pred_check
      _
    $region15: #{bert_cnn_forward.1} parent=1 // pred_check_branch
      %31 = sbr.rel (0) target = $region17
    $region16: #{bert_cnn_forward.1} parent=1 // pred_region
      _
    $region17: #{bert_cnn_forward.1} parent=1 // pred_fallthru
      _
    // Predicated region
    $region18: #{bert_cnn_forward.1} parent=1 // pred_check
      _
    $region19: #{bert_cnn_forward.1} parent=1 // pred_check_branch
      %33 = sbr.rel (0) target = $region21
    $region20: #{bert_cnn_forward.1} parent=1 // pred_region
      _
    $region21: #{bert_cnn_forward.1} parent=1 // pred_fallthru
      _
    // Predicated region
    $region22: #{bert_cnn_forward.1} parent=1 // pred_check
      _
    $region23: #{bert_cnn_forward.1} parent=1 // pred_check_branch
      %35 = sbr.rel (0) target = $region25
    $region24: #{bert_cnn_forward.1} parent=1 // pred_region
      _
    $region25: #{bert_cnn_forward.1} parent=1 // pred_fallthru
      _
    // Predicated region
    $region26: #{bert_cnn_forward.1} parent=1 // pred_check
      _
    $region27: #{bert_cnn_forward.1} parent=1 // pred_check_branch
      %37 = sbr.rel (0) target = $region29
    $region28: #{bert_cnn_forward.1} parent=1 // pred_region
      _
    $region29: #{bert_cnn_forward.1} parent=1 // pred_fallthru
      _
    // Predicated region
    $region30: #{bert_cnn_forward.1} parent=1 // pred_check
      _
    $region31: #{bert_cnn_forward.1} parent=1 // pred_check_branch
      %39 = sbr.rel (0) target = $region33
    $region32: #{bert_cnn_forward.1} parent=1 // pred_region
      _
    $region33: #{bert_cnn_forward.1} parent=1 // pred_fallthru
      _
    // Predicated region
    $region34: #{bert_cnn_forward.1} parent=1 // pred_check
      _
    $region35: #{bert_cnn_forward.1} parent=1 // pred_check_branch
      %41 = sbr.rel (0) target = $region37
    $region36: #{bert_cnn_forward.1} parent=1 // pred_region
      _
    $region37: #{bert_cnn_forward.1} parent=1 // pred_fallthru
      _
    // Predicated region
    $region38: #{bert_cnn_forward.1} parent=1 // pred_check
      _
    $region39: #{bert_cnn_forward.1} parent=1 // pred_check_branch
      %43 = sbr.rel (0) target = $region41
    $region40: #{bert_cnn_forward.1} parent=1 // pred_region
      _
    $region41: #{bert_cnn_forward.1} parent=1 // pred_fallthru
      _
    // Predicated region
    $region42: #{bert_cnn_forward.1} parent=1 // pred_check
      _
    $region43: #{bert_cnn_forward.1} parent=1 // pred_check_branch
      %45 = sbr.rel (0) target = $region45
    $region44: #{bert_cnn_forward.1} parent=1 // pred_region
      _
    $region45: #{bert_cnn_forward.1} parent=1 // pred_fallthru
      _
    // Predicated region
    $region46: #{bert_cnn_forward.1} parent=1 // pred_check
      _
    $region47: #{bert_cnn_forward.1} parent=1 // pred_check_branch
      %47 = sbr.rel (0) target = $region49
    $region48: #{bert_cnn_forward.1} parent=1 // pred_region
      _
    $region49: #{bert_cnn_forward.1} parent=1 // pred_fallthru
      _
    // Predicated region
    $region50: #{bert_cnn_forward.1} parent=1 // pred_check
      _
    $region51: #{bert_cnn_forward.1} parent=1 // pred_check_branch
      %49 = sbr.rel (0) target = $region53
    $region52: #{bert_cnn_forward.1} parent=1 // pred_region
      _
    $region53: #{bert_cnn_forward.1} parent=1 // pred_fallthru
      _
    // Predicated region
    $region54: #{bert_cnn_forward.1} parent=1 // pred_check
      _
    $region55: #{bert_cnn_forward.1} parent=1 // pred_check_branch
      %51 = sbr.rel (0) target = $region57
    $region56: #{bert_cnn_forward.1} parent=1 // pred_region
      _
    $region57: #{bert_cnn_forward.1} parent=1 // pred_fallthru
      _
    // Predicated region
    $region58: #{bert_cnn_forward.1} parent=1 // pred_check
      _
    $region59: #{bert_cnn_forward.1} parent=1 // pred_check_branch
      %53 = sbr.rel (0) target = $region61
    $region60: #{bert_cnn_forward.1} parent=1 // pred_region
      _
    $region61: #{bert_cnn_forward.1} parent=1 // pred_fallthru
      _
    // Predicated region
    $region62: #{bert_cnn_forward.1} parent=1 // pred_check
      _
    $region63: #{bert_cnn_forward.1} parent=1 // pred_check_branch
      %55 = sbr.rel (0) target = $region65
    $region64: #{bert_cnn_forward.1} parent=1 // pred_region
      _
    $region65: #{bert_cnn_forward.1} parent=1 // pred_fallthru
      _
    // Predicated region
    $region66: #{bert_cnn_forward.1} parent=1 // pred_check
      _
    $region67: #{bert_cnn_forward.1} parent=1 // pred_check_branch
      %57 = sbr.rel (0) target = $region69
    $region68: #{bert_cnn_forward.1} parent=1 // pred_region
      _
    $region69: #{bert_cnn_forward.1} parent=1 // pred_fallthru
      _
    // Predicated region
    $region70: #{bert_cnn_forward.1} parent=1 // pred_check
      _
    $region71: #{bert_cnn_forward.1} parent=1 // pred_check_branch
      %59 = sbr.rel (0) target = $region73
    $region72: #{bert_cnn_forward.1} parent=1 // pred_region
      _
    $region73: #{bert_cnn_forward.1} parent=1 // pred_fallthru
      _
    %v60 = vld [vmem:[%s0] sm:$0xff]
    %v61 = vld [vmem:[%s0 + $0x8] sm:$0xff]
    %v62 = vld [vmem:[%s1] sm:$0xff]
    %v63 = vld [vmem:[%s1 + $0x8] sm:$0xff]
    %v64 = vld [vmem:[%s1 + $0x10] sm:$0xff]
    %v65 = vld [vmem:[%s1 + $0x18] sm:$0xff]
    %v66 = vld [vmem:[%s1 + $0x20] sm:$0xff]
    %v67 = vld [vmem:[%s1 + $0x28] sm:$0xff]
    %v68 = vld [vmem:[%s1 + $0x30] sm:$0xff]
    %v69 = vld [vmem:[%s1 + $0x38] sm:$0xff]
    %v70 = vld [vmem:[%s1 + $0x40] sm:$0xff]
    %v71 = vld [vmem:[%s1 + $0x48] sm:$0xff]
    %v72 = vld [vmem:[%s1 + $0x50] sm:$0xff]
    %v73 = vld [vmem:[%s1 + $0x58] sm:$0xff]
    %v74 = vld [vmem:[%s1 + $0x60] sm:$0xff]
    %v75 = vld [vmem:[%s1 + $0x68] sm:$0xff]
    %v76 = vld [vmem:[%s1 + $0x70] sm:$0xff]
    %v77 = vld [vmem:[%s1 + $0x78] sm:$0xff]
    %v78 = vld [vmem:[%s2] sm:$0xff]
    %v79 = vld [vmem:[%s3] sm:$0x1]
    %v80 = vld [vmem:[%s4] sm:$0x1]
    %v81 = vld [vmem:[%s5] sm:$0xff]
    %v82 = vld [vmem:[%s5 + $0x8] sm:$0xff]
    %v83 = vld [vmem:[%s5 + $0x10] sm:$0xff]
    %v84 = vld [vmem:[%s5 + $0x18] sm:$0xff]
    %v85 = vld [vmem:[%s5 + $0x20] sm:$0xff]
    %v86 = vld [vmem:[%s5 + $0x28] sm:$0xff]
    %v87 = vld [vmem:[%s5 + $0x30] sm:$0xff]
    %v88 = vld [vmem:[%s5 + $0x38] sm:$0xff]
    %v89 = vld [vmem:[%s6] sm:$0x1]
    %v90 = vld [vmem:[%s6 + $0x1] sm:$0x1]
    %v91 = vld [vmem:[%s7] sm:$0xff]
    %v92 = vld [vmem:[%s7 + $0x8] sm:$0xff]
    %v93 = vld [vmem:[%s7 + $0x10] sm:$0xff]
    %v94 = vld [vmem:[%s7 + $0x18] sm:$0xff]
    %v95 = vld [vmem:[%s7 + $0x20] sm:$0xff]
    %v96 = vld [vmem:[%s7 + $0x28] sm:$0xff]
    %v97 = vld [vmem:[%s7 + $0x30] sm:$0xff]
    %v98 = vld [vmem:[%s7 + $0x38] sm:$0xff]
    %v99 = vld [vmem:[%s8] sm:$0x1]
    %v100 = vld [vmem:[%s8 + $0x1] sm:$0x1]
    %v101 = vld [vmem:[%s9] sm:$0x1]
    %v102 = vld [vmem:[%s9 + $0x1] sm:$0x1]
    %v103 = vld [vmem:[%s10] sm:$0x1]
    %v104 = vld [vmem:[%s10 + $0x1] sm:$0x1]
    %v105 = vld [vmem:[%s11] sm:$0xff]
    %v106 = vld [vmem:[%s11 + $0x8] sm:$0xff]
    %v107 = vld [vmem:[%s11 + $0x10] sm:$0xff]
    %v108 = vld [vmem:[%s11 + $0x18] sm:$0xff]
    %v109 = vld [vmem:[%s11 + $0x20] sm:$0xff]
    %v110 = vld [vmem:[%s11 + $0x28] sm:$0xff]
    %v111 = vld [vmem:[%s11 + $0x30] sm:$0xff]
    %v112 = vld [vmem:[%s11 + $0x38] sm:$0xff]
    %v113 = vld [vmem:[%s12] sm:$0x1]
    %v114 = vld [vmem:[%s12 + $0x1] sm:$0x1]
    %v115 = vld [vmem:[%s13] sm:$0xff]
    %v116 = vld [vmem:[%s13 + $0x8] sm:$0xff]
    %v117 = vld [vmem:[%s13 + $0x10] sm:$0xff]
    %v118 = vld [vmem:[%s13 + $0x18] sm:$0xff]
    %v119 = vld [vmem:[%s13 + $0x20] sm:$0xff]
    %v120 = vld [vmem:[%s13 + $0x28] sm:$0xff]
    %v121 = vld [vmem:[%s13 + $0x30] sm:$0xff]
    %v122 = vld [vmem:[%s13 + $0x38] sm:$0xff]
    %v123 = vld [vmem:[%s13 + $0x40] sm:$0xff]
    %v124 = vld [vmem:[%s13 + $0x48] sm:$0xff]
    %v125 = vld [vmem:[%s13 + $0x50] sm:$0xff]
    %v126 = vld [vmem:[%s13 + $0x58] sm:$0xff]
    %v127 = vld [vmem:[%s13 + $0x60] sm:$0xff]
    %v128 = vld [vmem:[%s13 + $0x68] sm:$0xff]
    %v129 = vld [vmem:[%s13 + $0x70] sm:$0xff]
    %v130 = vld [vmem:[%s13 + $0x78] sm:$0xff]
    %v131 = vld [vmem:[%s14] sm:$0x1]
    %v132 = vld [vmem:[%s14 + $0x1] sm:$0x1]
    %v133 = vld [vmem:[%s15] sm:$0x1]
    %v134 = vld [vmem:[%s15 + $0x1] sm:$0x1]
    %v135 = vld [vmem:[%s16] sm:$0x1]
    %v136 = vld [vmem:[%s16 + $0x1] sm:$0x1]
    %v137 = vld [vmem:[%s17] sm:$0xff]
    %v138 = vld [vmem:[%s17 + $0x8] sm:$0xff]
    %v139 = vld [vmem:[%s17 + $0x10] sm:$0xff]
    %v140 = vld [vmem:[%s17 + $0x18] sm:$0xff]
    %v141 = vld [vmem:[%s17 + $0x20] sm:$0xff]
    %v142 = vld [vmem:[%s17 + $0x28] sm:$0xff]
    %v143 = vld [vmem:[%s17 + $0x30] sm:$0xff]
    %v144 = vld [vmem:[%s17 + $0x38] sm:$0xff]
    %v145 = vld [vmem:[%s17 + $0x40] sm:$0xff]
    %v146 = vld [vmem:[%s17 + $0x48] sm:$0xff]
    %v147 = vld [vmem:[%s17 + $0x50] sm:$0xff]
    %v148 = vld [vmem:[%s17 + $0x58] sm:$0xff]
    %v149 = vlaneseq
    %v150 = vand.u32 %v149, 127
    %151 = vset.pattern.permute.xlu0 0
    %152 = vperm.xlu0 %151, %v60
    %v153 = vpop.permute.xlu0 %152
    %154 = vset.pattern.permute.xlu0 0
    %155 = vperm.xlu0 %154, %v61
    %v156 = vpop.permute.xlu0 %155
    %vm157 = vcmp.eq.s32.totalorder %v153, %v150
    %vm158 = vcmp.eq.s32.totalorder %v156, %v150
    %v159 = vsel %vm157, 1, 0
    %v160 = vsel %vm158, 1, 0
    %v161 = vcvt.s32.f32 %v159
    %v162 = vcvt.s32.f32 %v160
    %163 = vmatpush.msra.mxu0 %v77
    %164 = vmatpush.msra.mxu0 %v76
    %165 = vmatpush.msra.mxu0 %v75
    %166 = vmatpush.msra.mxu0 %v74
    %167 = vmatpush.msra.mxu0 %v73
    %168 = vmatpush.msra.mxu0 %v72
    %169 = vmatpush.msra.mxu0 %v71
    %170 = vmatpush.msra.mxu0 %v70
    %171 = vmatpush.msra.mxu0 %v69
    %172 = vmatpush.msra.mxu0 %v68
    %173 = vmatpush.msra.mxu0 %v67
    %174 = vmatpush.msra.mxu0 %v66
    %175 = vmatpush.msra.mxu0 %v65
    %176 = vmatpush.msra.mxu0 %v64
    %177 = vmatpush.msra.mxu0 %v63
    %178 = vmatpush.msra.mxu0 %v62
    %179 = vmatmul.f32.gmra.mxu0 %v161
    %v180 = vpop.f32.mrf.mxu0
    %v181 = vadd.f32 0.0, %v180
    %182 = vmatmul.f32.gmra.mxu0 %v162
    %v183 = vpop.f32.mrf.mxu0
    %v184 = vadd.f32 0.0, %v183
    %185 = vdwg.mxu0
    %v186 = vadd.f32 %v181, %v78
    %v187 = vadd.f32 %v184, %v78
    %vm188 = vcmask 261120
    %v189 = vsel %vm188, %v186, 0.0
    %190 = vadd.xlane.f32.xlu0 %v189
    %v191 = vpop.xlane.xlu0 %190
    %v192 = vsel %vm188, %v187, 0.0
    %193 = vadd.xlane.f32.xlu0 %v192
    %v194 = vpop.xlane.xlu0 %193
    %v195 = vrcp.pop 32.0
    %v196 = vmul.f32 32.0, %v195
    %v197 = vsub.f32 1.0, %v196
    %v198 = vmul.f32 %v195, %v197
    %v199 = vadd.f32 %v195, %v198
    %vm200 = vweird.f32 %v195
    %v201 = vsel %vm200, %v195, %v199
    %v202 = vmul.f32 %v191, %v201
    %v203 = vmul.f32 %v194, %v201
    %v204 = vsub.f32 %v186, %v202
    %v205 = vsub.f32 %v187, %v203
    %v206 = vmul.f32 %v204, %v204
    %v207 = vmul.f32 %v205, %v205
    %v208 = vsel %vm188, %v206, 0.0
    %209 = vadd.xlane.f32.xlu0 %v208
    %v210 = vpop.xlane.xlu0 %209
    %v211 = vsel %vm188, %v207, 0.0
    %212 = vadd.xlane.f32.xlu0 %v211
    %v213 = vpop.xlane.xlu0 %212
    %v214 = vmul.f32 %v210, %v201
    %v215 = vmul.f32 %v213, %v201
    %v216 = vadd.f32 %v214, 1e-12
    %v217 = vadd.f32 %v215, 1e-12
    %v218 = vrsqrt.pop %v216
    %v219 = vmul.f32 %v218, %v216
    %v220 = vmul.f32 %v219, %v218
    %v221 = vmul.f32 0.5, %v220
    %v222 = vsub.f32 1.5, %v221
    %v223 = vmul.f32 %v218, %v222
    %vm224 = vweird.f32 %v216
    %vm225 = vweird.f32 %v218
    %vm226 = vmor %vm224, %vm225
    %v227 = vsel %vm226, %v218, %v223
    %v228 = vrsqrt.pop %v217
    %v229 = vmul.f32 %v228, %v217
    %v230 = vmul.f32 %v229, %v228
    %v231 = vmul.f32 0.5, %v230
    %v232 = vsub.f32 1.5, %v231
    %v233 = vmul.f32 %v228, %v232
    %vm234 = vweird.f32 %v217
    %vm235 = vweird.f32 %v228
    %vm236 = vmor %vm234, %vm235
    %v237 = vsel %vm236, %v228, %v233
    %v238 = vmul.f32 %v204, %v227
    %v239 = vmul.f32 %v205, %v237
    %v241 = vperm.slane %v79, 0
    %v243 = vmul.f32 %v238, %v241
    %v244 = vmul.f32 %v239, %v241
    %v246 = vperm.slane %v80, 0
    %v248 = vadd.f32 %v243, %v246
    %v249 = vadd.f32 %v244, %v246
    %v251 = vperm.slane %v89, 0
    %v254 = vsel %vm188, %v248, 0
    %v257 = vsel %vm188, %v249, 0
    %259 = vmatpush.msra.mxu0 0.0
    %260 = vmatpush.msra.mxu0 0.0
    %261 = vmatpush.msra.mxu0 0.0
    %262 = vmatpush.msra.mxu0 0.0
    %263 = vmatpush.msra.mxu0 0.0
    %264 = vmatpush.msra.mxu0 0.0
    %265 = vmatpush.msra.mxu0 0.0
    %266 = vmatpush.msra.mxu0 0.0
    %267 = vmatpush.msra.mxu0 0.0
    %268 = vmatpush.msra.mxu0 0.0
    %269 = vmatpush.msra.mxu0 0.0
    %270 = vmatpush.msra.mxu0 0.0
    %271 = vmatpush.msra.mxu0 %v84
    %272 = vmatpush.msra.mxu0 %v83
    %273 = vmatpush.msra.mxu0 %v82
    %274 = vmatpush.msra.mxu0 %v81
    %275 = vmatmul.f32.gmra.mxu0 %v254
    %v276 = vpop.f32.mrf.mxu0
    %v277 = vadd.f32 %v251, %v276
    %278 = vmatmul.f32.gmra.mxu0 %v257
    %v279 = vpop.f32.mrf.mxu0
    %v280 = vadd.f32 %v251, %v279
    %281 = vdwg.mxu0
    %284 = vrot.lane.b32.xlu0 %v277, 120
    %v285 = vpop.permute.xlu0 %284
    %286 = vrot.lane.b32.xlu0 %v280, 120
    %v287 = vpop.permute.xlu0 %286
    %288 = vrot.lane.b32.xlu0 %v277, 112
    %v289 = vpop.permute.xlu0 %288
    %290 = vrot.lane.b32.xlu0 %v280, 112
    %v291 = vpop.permute.xlu0 %290
    %292 = vrot.lane.b32.xlu0 %v277, 104
    %v293 = vpop.permute.xlu0 %292
    %294 = vrot.lane.b32.xlu0 %v280, 104
    %v295 = vpop.permute.xlu0 %294
    %296 = vrot.lane.b32.xlu0 %v277, 96
    %v297 = vpop.permute.xlu0 %296
    %vm298 = vcmask 64512
    %v299 = vsel %vm298, %v277, 0
    %v301 = vsel %vm298, %v297, 0
    %303 = vmatpush.xpose.msra.mxu0 0.0
    %304 = vmatpush.xpose.msra.mxu0 0.0
    %305 = vmatpush.xpose.msra.mxu0 0.0
    %306 = vmatpush.xpose.msra.mxu0 0.0
    %307 = vmatpush.xpose.msra.mxu0 0.0
    %308 = vmatpush.xpose.msra.mxu0 0.0
    %309 = vmatpush.xpose.msra.mxu0 0.0
    %310 = vmatpush.xpose.msra.mxu0 0.0
    %311 = vmatpush.xpose.msra.mxu0 0.0
    %312 = vmatpush.xpose.msra.mxu0 0.0
    %313 = vmatpush.xpose.msra.mxu0 0.0
    %314 = vmatpush.xpose.msra.mxu0 0.0
    %315 = vmatpush.xpose.msra.mxu0 0.0
    %316 = vmatpush.xpose.msra.mxu0 0.0
    %317 = vmatpush.xpose.msra.mxu0 0.0
    %318 = vmatpush.xpose.msra.mxu0 %v301
    %319 = vmatmul.f32.gmra.mxu0 %v299
    %v320 = vpop.f32.mrf.mxu0
    %v321 = vadd.f32 0.0, %v320
    %322 = vdwg.mxu0
    %323 = vrot.lane.b32.xlu0 %v280, 96
    %v324 = vpop.permute.xlu0 %323
    %v325 = vsel %vm298, %v280, 0
    %v327 = vsel %vm298, %v324, 0
    %329 = vmatpush.xpose.msra.mxu0 0.0
    %330 = vmatpush.xpose.msra.mxu0 0.0
    %331 = vmatpush.xpose.msra.mxu0 0.0
    %332 = vmatpush.xpose.msra.mxu0 0.0
    %333 = vmatpush.xpose.msra.mxu0 0.0
    %334 = vmatpush.xpose.msra.mxu0 0.0
    %335 = vmatpush.xpose.msra.mxu0 0.0
    %336 = vmatpush.xpose.msra.mxu0 0.0
    %337 = vmatpush.xpose.msra.mxu0 0.0
    %338 = vmatpush.xpose.msra.mxu0 0.0
    %339 = vmatpush.xpose.msra.mxu0 0.0
    %340 = vmatpush.xpose.msra.mxu0 0.0
    %341 = vmatpush.xpose.msra.mxu0 0.0
    %342 = vmatpush.xpose.msra.mxu0 0.0
    %343 = vmatpush.xpose.msra.mxu0 0.0
    %344 = vmatpush.xpose.msra.mxu0 %v327
    %345 = vmatmul.f32.gmra.mxu0 %v325
    %v346 = vpop.f32.mrf.mxu0
    %v347 = vadd.f32 0.0, %v346
    %348 = vdwg.mxu0
    %349 = vrot.lane.b32.xlu0 %v285, 96
    %v350 = vpop.permute.xlu0 %349
    %v351 = vsel %vm298, %v285, 0
    %v353 = vsel %vm298, %v350, 0
    %355 = vmatpush.xpose.msra.mxu0 0.0
    %356 = vmatpush.xpose.msra.mxu0 0.0
    %357 = vmatpush.xpose.msra.mxu0 0.0
    %358 = vmatpush.xpose.msra.mxu0 0.0
    %359 = vmatpush.xpose.msra.mxu0 0.0
    %360 = vmatpush.xpose.msra.mxu0 0.0
    %361 = vmatpush.xpose.msra.mxu0 0.0
    %362 = vmatpush.xpose.msra.mxu0 0.0
    %363 = vmatpush.xpose.msra.mxu0 0.0
    %364 = vmatpush.xpose.msra.mxu0 0.0
    %365 = vmatpush.xpose.msra.mxu0 0.0
    %366 = vmatpush.xpose.msra.mxu0 0.0
    %367 = vmatpush.xpose.msra.mxu0 0.0
    %368 = vmatpush.xpose.msra.mxu0 0.0
    %369 = vmatpush.xpose.msra.mxu0 0.0
    %370 = vmatpush.xpose.msra.mxu0 %v353
    %371 = vmatmul.f32.gmra.mxu0 %v351
    %v372 = vpop.f32.mrf.mxu0
    %v373 = vadd.f32 0.0, %v372
    %374 = vdwg.mxu0
    %375 = vrot.lane.b32.xlu0 %v287, 96
    %v376 = vpop.permute.xlu0 %375
    %v377 = vsel %vm298, %v287, 0
    %v379 = vsel %vm298, %v376, 0
    %381 = vmatpush.xpose.msra.mxu0 0.0
    %382 = vmatpush.xpose.msra.mxu0 0.0
    %383 = vmatpush.xpose.msra.mxu0 0.0
    %384 = vmatpush.xpose.msra.mxu0 0.0
    %385 = vmatpush.xpose.msra.mxu0 0.0
    %386 = vmatpush.xpose.msra.mxu0 0.0
    %387 = vmatpush.xpose.msra.mxu0 0.0
    %388 = vmatpush.xpose.msra.mxu0 0.0
    %389 = vmatpush.xpose.msra.mxu0 0.0
    %390 = vmatpush.xpose.msra.mxu0 0.0
    %391 = vmatpush.xpose.msra.mxu0 0.0
    %392 = vmatpush.xpose.msra.mxu0 0.0
    %393 = vmatpush.xpose.msra.mxu0 0.0
    %394 = vmatpush.xpose.msra.mxu0 0.0
    %395 = vmatpush.xpose.msra.mxu0 0.0
    %396 = vmatpush.xpose.msra.mxu0 %v379
    %397 = vmatmul.f32.gmra.mxu0 %v377
    %v398 = vpop.f32.mrf.mxu0
    %v399 = vadd.f32 0.0, %v398
    %400 = vdwg.mxu0
    %401 = vrot.lane.b32.xlu0 %v289, 96
    %v402 = vpop.permute.xlu0 %401
    %v403 = vsel %vm298, %v289, 0
    %v405 = vsel %vm298, %v402, 0
    %407 = vmatpush.xpose.msra.mxu0 0.0
    %408 = vmatpush.xpose.msra.mxu0 0.0
    %409 = vmatpush.xpose.msra.mxu0 0.0
    %410 = vmatpush.xpose.msra.mxu0 0.0
    %411 = vmatpush.xpose.msra.mxu0 0.0
    %412 = vmatpush.xpose.msra.mxu0 0.0
    %413 = vmatpush.xpose.msra.mxu0 0.0
    %414 = vmatpush.xpose.msra.mxu0 0.0
    %415 = vmatpush.xpose.msra.mxu0 0.0
    %416 = vmatpush.xpose.msra.mxu0 0.0
    %417 = vmatpush.xpose.msra.mxu0 0.0
    %418 = vmatpush.xpose.msra.mxu0 0.0
    %419 = vmatpush.xpose.msra.mxu0 0.0
    %420 = vmatpush.xpose.msra.mxu0 0.0
    %421 = vmatpush.xpose.msra.mxu0 0.0
    %422 = vmatpush.xpose.msra.mxu0 %v405
    %423 = vmatmul.f32.gmra.mxu0 %v403
    %v424 = vpop.f32.mrf.mxu0
    %v425 = vadd.f32 0.0, %v424
    %426 = vdwg.mxu0
    %427 = vrot.lane.b32.xlu0 %v291, 96
    %v428 = vpop.permute.xlu0 %427
    %v429 = vsel %vm298, %v291, 0
    %v431 = vsel %vm298, %v428, 0
    %433 = vmatpush.xpose.msra.mxu0 0.0
    %434 = vmatpush.xpose.msra.mxu0 0.0
    %435 = vmatpush.xpose.msra.mxu0 0.0
    %436 = vmatpush.xpose.msra.mxu0 0.0
    %437 = vmatpush.xpose.msra.mxu0 0.0
    %438 = vmatpush.xpose.msra.mxu0 0.0
    %439 = vmatpush.xpose.msra.mxu0 0.0
    %440 = vmatpush.xpose.msra.mxu0 0.0
    %441 = vmatpush.xpose.msra.mxu0 0.0
    %442 = vmatpush.xpose.msra.mxu0 0.0
    %443 = vmatpush.xpose.msra.mxu0 0.0
    %444 = vmatpush.xpose.msra.mxu0 0.0
    %445 = vmatpush.xpose.msra.mxu0 0.0
    %446 = vmatpush.xpose.msra.mxu0 0.0
    %447 = vmatpush.xpose.msra.mxu0 0.0
    %448 = vmatpush.xpose.msra.mxu0 %v431
    %449 = vmatmul.f32.gmra.mxu0 %v429
    %v450 = vpop.f32.mrf.mxu0
    %v451 = vadd.f32 0.0, %v450
    %452 = vdwg.mxu0
    %453 = vrot.lane.b32.xlu0 %v293, 96
    %v454 = vpop.permute.xlu0 %453
    %v455 = vsel %vm298, %v293, 0
    %v457 = vsel %vm298, %v454, 0
    %459 = vmatpush.xpose.msra.mxu0 0.0
    %460 = vmatpush.xpose.msra.mxu0 0.0
    %461 = vmatpush.xpose.msra.mxu0 0.0
    %462 = vmatpush.xpose.msra.mxu0 0.0
    %463 = vmatpush.xpose.msra.mxu0 0.0
    %464 = vmatpush.xpose.msra.mxu0 0.0
    %465 = vmatpush.xpose.msra.mxu0 0.0
    %466 = vmatpush.xpose.msra.mxu0 0.0
    %467 = vmatpush.xpose.msra.mxu0 0.0
    %468 = vmatpush.xpose.msra.mxu0 0.0
    %469 = vmatpush.xpose.msra.mxu0 0.0
    %470 = vmatpush.xpose.msra.mxu0 0.0
    %471 = vmatpush.xpose.msra.mxu0 0.0
    %472 = vmatpush.xpose.msra.mxu0 0.0
    %473 = vmatpush.xpose.msra.mxu0 0.0
    %474 = vmatpush.xpose.msra.mxu0 %v457
    %475 = vmatmul.f32.gmra.mxu0 %v455
    %v476 = vpop.f32.mrf.mxu0
    %v477 = vadd.f32 0.0, %v476
    %478 = vdwg.mxu0
    %479 = vrot.lane.b32.xlu0 %v295, 96
    %v480 = vpop.permute.xlu0 %479
    %v481 = vsel %vm298, %v295, 0
    %v483 = vsel %vm298, %v480, 0
    %485 = vmatpush.xpose.msra.mxu0 0.0
    %486 = vmatpush.xpose.msra.mxu0 0.0
    %487 = vmatpush.xpose.msra.mxu0 0.0
    %488 = vmatpush.xpose.msra.mxu0 0.0
    %489 = vmatpush.xpose.msra.mxu0 0.0
    %490 = vmatpush.xpose.msra.mxu0 0.0
    %491 = vmatpush.xpose.msra.mxu0 0.0
    %492 = vmatpush.xpose.msra.mxu0 0.0
    %493 = vmatpush.xpose.msra.mxu0 0.0
    %494 = vmatpush.xpose.msra.mxu0 0.0
    %495 = vmatpush.xpose.msra.mxu0 0.0
    %496 = vmatpush.xpose.msra.mxu0 0.0
    %497 = vmatpush.xpose.msra.mxu0 0.0
    %498 = vmatpush.xpose.msra.mxu0 0.0
    %499 = vmatpush.xpose.msra.mxu0 0.0
    %500 = vmatpush.xpose.msra.mxu0 %v483
    %501 = vmatmul.f32.gmra.mxu0 %v481
    %v502 = vpop.f32.mrf.mxu0
    %v503 = vadd.f32 0.0, %v502
    %504 = vdwg.mxu0
    %v505 = vsel %vm298, %v321, -inf
    %506 = vmax.xlane.f32.xlu0 %v505
    %v507 = vpop.xlane.xlu0 %506
    %v508 = vsel %vm298, %v347, -inf
    %509 = vmax.xlane.f32.xlu0 %v508
    %v510 = vpop.xlane.xlu0 %509
    %v511 = vsel %vm298, %v373, -inf
    %512 = vmax.xlane.f32.xlu0 %v511
    %v513 = vpop.xlane.xlu0 %512
    %v514 = vsel %vm298, %v399, -inf
    %515 = vmax.xlane.f32.xlu0 %v514
    %v516 = vpop.xlane.xlu0 %515
    %v517 = vsel %vm298, %v425, -inf
    %518 = vmax.xlane.f32.xlu0 %v517
    %v519 = vpop.xlane.xlu0 %518
    %v520 = vsel %vm298, %v451, -inf
    %521 = vmax.xlane.f32.xlu0 %v520
    %v522 = vpop.xlane.xlu0 %521
    %v523 = vsel %vm298, %v477, -inf
    %524 = vmax.xlane.f32.xlu0 %v523
    %v525 = vpop.xlane.xlu0 %524
    %v526 = vsel %vm298, %v503, -inf
    %527 = vmax.xlane.f32.xlu0 %v526
    %v528 = vpop.xlane.xlu0 %527
    %v529 = vsub.f32 %v321, %v507
    %v530 = vsub.f32 %v347, %v510
    %v531 = vsub.f32 %v373, %v513
    %v532 = vsub.f32 %v399, %v516
    %v533 = vsub.f32 %v425, %v519
    %v534 = vsub.f32 %v451, %v522
    %v535 = vsub.f32 %v477, %v525
    %v536 = vsub.f32 %v503, %v528
    %v537 = vmul.f32 %v529, 1.442695
    %v538 = vpow.pop %v537
    %v539 = vmul.f32 %v530, 1.442695
    %v540 = vpow.pop %v539
    %v541 = vmul.f32 %v531, 1.442695
    %v542 = vpow.pop %v541
    %v543 = vmul.f32 %v532, 1.442695
    %v544 = vpow.pop %v543
    %v545 = vmul.f32 %v533, 1.442695
    %v546 = vpow.pop %v545
    %v547 = vmul.f32 %v534, 1.442695
    %v548 = vpow.pop %v547
    %v549 = vmul.f32 %v535, 1.442695
    %v550 = vpow.pop %v549
    %v551 = vmul.f32 %v536, 1.442695
    %v552 = vpow.pop %v551
    %v553 = vsel %vm298, %v538, 0.0
    %554 = vadd.xlane.f32.xlu0 %v553
    %v555 = vpop.xlane.xlu0 %554
    %v556 = vsel %vm298, %v540, 0.0
    %557 = vadd.xlane.f32.xlu0 %v556
    %v558 = vpop.xlane.xlu0 %557
    %v559 = vsel %vm298, %v542, 0.0
    %560 = vadd.xlane.f32.xlu0 %v559
    %v561 = vpop.xlane.xlu0 %560
    %v562 = vsel %vm298, %v544, 0.0
    %563 = vadd.xlane.f32.xlu0 %v562
    %v564 = vpop.xlane.xlu0 %563
    %v565 = vsel %vm298, %v546, 0.0
    %566 = vadd.xlane.f32.xlu0 %v565
    %v567 = vpop.xlane.xlu0 %566
    %v568 = vsel %vm298, %v548, 0.0
    %569 = vadd.xlane.f32.xlu0 %v568
    %v570 = vpop.xlane.xlu0 %569
    %v571 = vsel %vm298, %v550, 0.0
    %572 = vadd.xlane.f32.xlu0 %v571
    %v573 = vpop.xlane.xlu0 %572
    %v574 = vsel %vm298, %v552, 0.0
    %575 = vadd.xlane.f32.xlu0 %v574
    %v576 = vpop.xlane.xlu0 %575
    %v577 = vrcp.pop %v555
    %v578 = vrcp.pop %v558
    %v579 = vrcp.pop %v561
    %v580 = vrcp.pop %v564
    %v581 = vrcp.pop %v567
    %v582 = vrcp.pop %v570
    %v583 = vrcp.pop %v573
    %v584 = vrcp.pop %v576
    %v585 = vmul.f32 %v538, %v577
    %v586 = vmul.f32 %v540, %v578
    %v587 = vmul.f32 %v542, %v579
    %v588 = vmul.f32 %v544, %v580
    %v589 = vmul.f32 %v546, %v581
    %v590 = vmul.f32 %v548, %v582
    %v591 = vmul.f32 %v550, %v583
    %v592 = vmul.f32 %v552, %v584
    %593 = vrot.lane.b32.xlu0 %v277, 64
    %v594 = vpop.permute.xlu0 %593
    %v597 = vsel %vm298, %v585, 0
    %599 = vmatpush.msra.mxu0 0.0
    %600 = vmatpush.msra.mxu0 0.0
    %601 = vmatpush.msra.mxu0 0.0
    %602 = vmatpush.msra.mxu0 0.0
    %603 = vmatpush.msra.mxu0 0.0
    %604 = vmatpush.msra.mxu0 0.0
    %605 = vmatpush.msra.mxu0 0.0
    %606 = vmatpush.msra.mxu0 0.0
    %607 = vmatpush.msra.mxu0 0.0
    %608 = vmatpush.msra.mxu0 0.0
    %609 = vmatpush.msra.mxu0 0.0
    %610 = vmatpush.msra.mxu0 0.0
    %611 = vmatpush.msra.mxu0 0.0
    %612 = vmatpush.msra.mxu0 0.0
    %613 = vmatpush.msra.mxu0 0.0
    %614 = vmatpush.msra.mxu0 %v594
    %615 = vmatmul.f32.gmra.mxu0 %v597
    %v616 = vpop.f32.mrf.mxu0
    %v617 = vadd.f32 0.0, %v616
    %618 = vdwg.mxu0
    %619 = vrot.lane.b32.xlu0 %v280, 64
    %v620 = vpop.permute.xlu0 %619
    %v623 = vsel %vm298, %v586, 0
    %625 = vmatpush.msra.mxu0 0.0
    %626 = vmatpush.msra.mxu0 0.0
    %627 = vmatpush.msra.mxu0 0.0
    %628 = vmatpush.msra.mxu0 0.0
    %629 = vmatpush.msra.mxu0 0.0
    %630 = vmatpush.msra.mxu0 0.0
    %631 = vmatpush.msra.mxu0 0.0
    %632 = vmatpush.msra.mxu0 0.0
    %633 = vmatpush.msra.mxu0 0.0
    %634 = vmatpush.msra.mxu0 0.0
    %635 = vmatpush.msra.mxu0 0.0
    %636 = vmatpush.msra.mxu0 0.0
    %637 = vmatpush.msra.mxu0 0.0
    %638 = vmatpush.msra.mxu0 0.0
    %639 = vmatpush.msra.mxu0 0.0
    %640 = vmatpush.msra.mxu0 %v620
    %641 = vmatmul.f32.gmra.mxu0 %v623
    %v642 = vpop.f32.mrf.mxu0
    %v643 = vadd.f32 0.0, %v642
    %644 = vdwg.mxu0
    %645 = vrot.lane.b32.xlu0 %v285, 64
    %v646 = vpop.permute.xlu0 %645
    %v649 = vsel %vm298, %v587, 0
    %651 = vmatpush.msra.mxu0 0.0
    %652 = vmatpush.msra.mxu0 0.0
    %653 = vmatpush.msra.mxu0 0.0
    %654 = vmatpush.msra.mxu0 0.0
    %655 = vmatpush.msra.mxu0 0.0
    %656 = vmatpush.msra.mxu0 0.0
    %657 = vmatpush.msra.mxu0 0.0
    %658 = vmatpush.msra.mxu0 0.0
    %659 = vmatpush.msra.mxu0 0.0
    %660 = vmatpush.msra.mxu0 0.0
    %661 = vmatpush.msra.mxu0 0.0
    %662 = vmatpush.msra.mxu0 0.0
    %663 = vmatpush.msra.mxu0 0.0
    %664 = vmatpush.msra.mxu0 0.0
    %665 = vmatpush.msra.mxu0 0.0
    %666 = vmatpush.msra.mxu0 %v646
    %667 = vmatmul.f32.gmra.mxu0 %v649
    %v668 = vpop.f32.mrf.mxu0
    %v669 = vadd.f32 0.0, %v668
    %670 = vdwg.mxu0
    %671 = vrot.lane.b32.xlu0 %v287, 64
    %v672 = vpop.permute.xlu0 %671
    %v675 = vsel %vm298, %v588, 0
    %677 = vmatpush.msra.mxu0 0.0
    %678 = vmatpush.msra.mxu0 0.0
    %679 = vmatpush.msra.mxu0 0.0
    %680 = vmatpush.msra.mxu0 0.0
    %681 = vmatpush.msra.mxu0 0.0
    %682 = vmatpush.msra.mxu0 0.0
    %683 = vmatpush.msra.mxu0 0.0
    %684 = vmatpush.msra.mxu0 0.0
    %685 = vmatpush.msra.mxu0 0.0
    %686 = vmatpush.msra.mxu0 0.0
    %687 = vmatpush.msra.mxu0 0.0
    %688 = vmatpush.msra.mxu0 0.0
    %689 = vmatpush.msra.mxu0 0.0
    %690 = vmatpush.msra.mxu0 0.0
    %691 = vmatpush.msra.mxu0 0.0
    %692 = vmatpush.msra.mxu0 %v672
    %693 = vmatmul.f32.gmra.mxu0 %v675
    %v694 = vpop.f32.mrf.mxu0
    %v695 = vadd.f32 0.0, %v694
    %696 = vdwg.mxu0
    %697 = vrot.lane.b32.xlu0 %v289, 64
    %v698 = vpop.permute.xlu0 %697
    %v701 = vsel %vm298, %v589, 0
    %703 = vmatpush.msra.mxu0 0.0
    %704 = vmatpush.msra.mxu0 0.0
    %705 = vmatpush.msra.mxu0 0.0
    %706 = vmatpush.msra.mxu0 0.0
    %707 = vmatpush.msra.mxu0 0.0
    %708 = vmatpush.msra.mxu0 0.0
    %709 = vmatpush.msra.mxu0 0.0
    %710 = vmatpush.msra.mxu0 0.0
    %711 = vmatpush.msra.mxu0 0.0
    %712 = vmatpush.msra.mxu0 0.0
    %713 = vmatpush.msra.mxu0 0.0
    %714 = vmatpush.msra.mxu0 0.0
    %715 = vmatpush.msra.mxu0 0.0
    %716 = vmatpush.msra.mxu0 0.0
    %717 = vmatpush.msra.mxu0 0.0
    %718 = vmatpush.msra.mxu0 %v698
    %719 = vmatmul.f32.gmra.mxu0 %v701
    %v720 = vpop.f32.mrf.mxu0
    %v721 = vadd.f32 0.0, %v720
    %722 = vdwg.mxu0
    %723 = vrot.lane.b32.xlu0 %v291, 64
    %v724 = vpop.permute.xlu0 %723
    %v727 = vsel %vm298, %v590, 0
    %729 = vmatpush.msra.mxu0 0.0
    %730 = vmatpush.msra.mxu0 0.0
    %731 = vmatpush.msra.mxu0 0.0
    %732 = vmatpush.msra.mxu0 0.0
    %733 = vmatpush.msra.mxu0 0.0
    %734 = vmatpush.msra.mxu0 0.0
    %735 = vmatpush.msra.mxu0 0.0
    %736 = vmatpush.msra.mxu0 0.0
    %737 = vmatpush.msra.mxu0 0.0
    %738 = vmatpush.msra.mxu0 0.0
    %739 = vmatpush.msra.mxu0 0.0
    %740 = vmatpush.msra.mxu0 0.0
    %741 = vmatpush.msra.mxu0 0.0
    %742 = vmatpush.msra.mxu0 0.0
    %743 = vmatpush.msra.mxu0 0.0
    %744 = vmatpush.msra.mxu0 %v724
    %745 = vmatmul.f32.gmra.mxu0 %v727
    %v746 = vpop.f32.mrf.mxu0
    %v747 = vadd.f32 0.0, %v746
    %748 = vdwg.mxu0
    %749 = vrot.lane.b32.xlu0 %v293, 64
    %v750 = vpop.permute.xlu0 %749
    %v753 = vsel %vm298, %v591, 0
    %755 = vmatpush.msra.mxu0 0.0
    %756 = vmatpush.msra.mxu0 0.0
    %757 = vmatpush.msra.mxu0 0.0
    %758 = vmatpush.msra.mxu0 0.0
    %759 = vmatpush.msra.mxu0 0.0
    %760 = vmatpush.msra.mxu0 0.0
    %761 = vmatpush.msra.mxu0 0.0
    %762 = vmatpush.msra.mxu0 0.0
    %763 = vmatpush.msra.mxu0 0.0
    %764 = vmatpush.msra.mxu0 0.0
    %765 = vmatpush.msra.mxu0 0.0
    %766 = vmatpush.msra.mxu0 0.0
    %767 = vmatpush.msra.mxu0 0.0
    %768 = vmatpush.msra.mxu0 0.0
    %769 = vmatpush.msra.mxu0 0.0
    %770 = vmatpush.msra.mxu0 %v750
    %771 = vmatmul.f32.gmra.mxu0 %v753
    %v772 = vpop.f32.mrf.mxu0
    %v773 = vadd.f32 0.0, %v772
    %774 = vdwg.mxu0
    %775 = vrot.lane.b32.xlu0 %v295, 64
    %v776 = vpop.permute.xlu0 %775
    %v779 = vsel %vm298, %v592, 0
    %781 = vmatpush.msra.mxu0 0.0
    %782 = vmatpush.msra.mxu0 0.0
    %783 = vmatpush.msra.mxu0 0.0
    %784 = vmatpush.msra.mxu0 0.0
    %785 = vmatpush.msra.mxu0 0.0
    %786 = vmatpush.msra.mxu0 0.0
    %787 = vmatpush.msra.mxu0 0.0
    %788 = vmatpush.msra.mxu0 0.0
    %789 = vmatpush.msra.mxu0 0.0
    %790 = vmatpush.msra.mxu0 0.0
    %791 = vmatpush.msra.mxu0 0.0
    %792 = vmatpush.msra.mxu0 0.0
    %793 = vmatpush.msra.mxu0 0.0
    %794 = vmatpush.msra.mxu0 0.0
    %795 = vmatpush.msra.mxu0 0.0
    %796 = vmatpush.msra.mxu0 %v776
    %797 = vmatmul.f32.gmra.mxu0 %v779
    %v798 = vpop.f32.mrf.mxu0
    %v799 = vadd.f32 0.0, %v798
    %800 = vdwg.mxu0
    %803 = vrot.lane.b32.xlu0 %v669, 8
    %v804 = vpop.permute.xlu0 %803
    %805 = vrot.lane.b32.xlu0 %v695, 8
    %v806 = vpop.permute.xlu0 %805
    %811 = vrot.lane.b32.xlu0 %v721, 16
    %v812 = vpop.permute.xlu0 %811
    %813 = vrot.lane.b32.xlu0 %v747, 16
    %v814 = vpop.permute.xlu0 %813
    %819 = vrot.lane.b32.xlu0 %v773, 24
    %v820 = vpop.permute.xlu0 %819
    %821 = vrot.lane.b32.xlu0 %v799, 24
    %v822 = vpop.permute.xlu0 %821
    %v825 = vsel %vm298, %v617, %v804
    %v826 = vsel %vm298, %v643, %v806
    %vm827 = vcmask 130048
    %v828 = vsel %vm827, %v825, %v812
    %v829 = vsel %vm827, %v826, %v814
    %vm830 = vcmask 195584
    %v831 = vsel %vm830, %v828, %v820
    %v832 = vsel %vm830, %v829, %v822
    %v834 = vperm.slane %v99, 0
    %v837 = vsel %vm188, %v831, 0
    %v840 = vsel %vm188, %v832, 0
    %842 = vmatpush.msra.mxu0 0.0
    %843 = vmatpush.msra.mxu0 0.0
    %844 = vmatpush.msra.mxu0 0.0
    %845 = vmatpush.msra.mxu0 0.0
    %846 = vmatpush.msra.mxu0 0.0
    %847 = vmatpush.msra.mxu0 0.0
    %848 = vmatpush.msra.mxu0 0.0
    %849 = vmatpush.msra.mxu0 0.0
    %850 = vmatpush.msra.mxu0 0.0
    %851 = vmatpush.msra.mxu0 0.0
    %852 = vmatpush.msra.mxu0 0.0
    %853 = vmatpush.msra.mxu0 0.0
    %854 = vmatpush.msra.mxu0 %v94
    %855 = vmatpush.msra.mxu0 %v93
    %856 = vmatpush.msra.mxu0 %v92
    %857 = vmatpush.msra.mxu0 %v91
    %858 = vmatmul.f32.gmra.mxu0 %v837
    %v859 = vpop.f32.mrf.mxu0
    %v860 = vadd.f32 %v834, %v859
    %861 = vmatmul.f32.gmra.mxu0 %v840
    %v862 = vpop.f32.mrf.mxu0
    %v863 = vadd.f32 %v834, %v862
    %864 = vdwg.mxu0
    %v865 = vadd.f32 %v248, %v860
    %v866 = vadd.f32 %v249, %v863
    %v867 = vsel %vm188, %v865, 0.0
    %868 = vadd.xlane.f32.xlu0 %v867
    %v869 = vpop.xlane.xlu0 %868
    %v870 = vsel %vm188, %v866, 0.0
    %871 = vadd.xlane.f32.xlu0 %v870
    %v872 = vpop.xlane.xlu0 %871
    %v873 = vmul.f32 %v869, %v201
    %v874 = vmul.f32 %v872, %v201
    %v875 = vsub.f32 %v865, %v873
    %v876 = vsub.f32 %v866, %v874
    %v877 = vmul.f32 %v875, %v875
    %v878 = vmul.f32 %v876, %v876
    %v879 = vsel %vm188, %v877, 0.0
    %880 = vadd.xlane.f32.xlu0 %v879
    %v881 = vpop.xlane.xlu0 %880
    %v882 = vsel %vm188, %v878, 0.0
    %883 = vadd.xlane.f32.xlu0 %v882
    %v884 = vpop.xlane.xlu0 %883
    %v885 = vmul.f32 %v881, %v201
    %v886 = vmul.f32 %v884, %v201
    %v887 = vadd.f32 %v885, 1e-12
    %v888 = vadd.f32 %v886, 1e-12
    %v889 = vrsqrt.pop %v887
    %v890 = vmul.f32 %v889, %v887
    %v891 = vmul.f32 %v890, %v889
    %v892 = vmul.f32 0.5, %v891
    %v893 = vsub.f32 1.5, %v892
    %v894 = vmul.f32 %v889, %v893
    %vm895 = vweird.f32 %v887
    %vm896 = vweird.f32 %v889
    %vm897 = vmor %vm895, %vm896
    %v898 = vsel %vm897, %v889, %v894
    %v899 = vrsqrt.pop %v888
    %v900 = vmul.f32 %v899, %v888
    %v901 = vmul.f32 %v900, %v899
    %v902 = vmul.f32 0.5, %v901
    %v903 = vsub.f32 1.5, %v902
    %v904 = vmul.f32 %v899, %v903
    %vm905 = vweird.f32 %v888
    %vm906 = vweird.f32 %v899
    %vm907 = vmor %vm905, %vm906
    %v908 = vsel %vm907, %v899, %v904
    %v909 = vmul.f32 %v875, %v898
    %v910 = vmul.f32 %v876, %v908
    %v912 = vperm.slane %v101, 0
    %v914 = vmul.f32 %v909, %v912
    %v915 = vmul.f32 %v910, %v912
    %v917 = vperm.slane %v103, 0
    %v919 = vadd.f32 %v914, %v917
    %v920 = vadd.f32 %v915, %v917
    %v922 = vperm.slane %v113, 0
    %v925 = vsel %vm188, %v919, 0
    %v928 = vsel %vm188, %v920, 0
    %930 = vmatpush.msra.mxu0 0.0
    %931 = vmatpush.msra.mxu0 0.0
    %932 = vmatpush.msra.mxu0 0.0
    %933 = vmatpush.msra.mxu0 0.0
    %934 = vmatpush.msra.mxu0 0.0
    %935 = vmatpush.msra.mxu0 0.0
    %936 = vmatpush.msra.mxu0 0.0
    %937 = vmatpush.msra.mxu0 0.0
    %938 = vmatpush.msra.mxu0 0.0
    %939 = vmatpush.msra.mxu0 0.0
    %940 = vmatpush.msra.mxu0 0.0
    %941 = vmatpush.msra.mxu0 0.0
    %942 = vmatpush.msra.mxu0 %v108
    %943 = vmatpush.msra.mxu0 %v107
    %944 = vmatpush.msra.mxu0 %v106
    %945 = vmatpush.msra.mxu0 %v105
    %946 = vmatmul.f32.gmra.mxu0 %v925
    %v947 = vpop.f32.mrf.mxu0
    %v948 = vadd.f32 %v922, %v947
    %949 = vmatmul.f32.gmra.mxu0 %v928
    %v950 = vpop.f32.mrf.mxu0
    %v951 = vadd.f32 %v922, %v950
    %952 = vdwg.mxu0
    %v953 = vmul.f32 %v948, 0.5
    %v954 = vmul.f32 %v951, 0.5
    %v955 = vmul.f32 %v948, 0.044715
    %v956 = vmul.f32 %v951, 0.044715
    %v957 = vmul.f32 %v955, %v948
    %v958 = vmul.f32 %v956, %v951
    %v959 = vmul.f32 %v957, %v948
    %v960 = vmul.f32 %v958, %v951
    %v961 = vadd.f32 %v948, %v959
    %v962 = vadd.f32 %v951, %v960
    %v963 = vmul.f32 %v961, 0.7978846
    %v964 = vmul.f32 %v962, 0.7978846
    %v965 = vtanh.pop %v963
    %v966 = vtanh.pop %v964
    %v967 = vadd.f32 %v965, 1.0
    %v968 = vadd.f32 %v966, 1.0
    %v969 = vmul.f32 %v953, %v967
    %v970 = vmul.f32 %v954, %v968
    %v972 = vperm.slane %v131, 0
    %vm974 = vcmask 523264
    %v976 = vsel %vm974, %v969, 0
    %v979 = vsel %vm974, %v970, 0
    %981 = vmatpush.msra.mxu0 0.0
    %982 = vmatpush.msra.mxu0 0.0
    %983 = vmatpush.msra.mxu0 0.0
    %984 = vmatpush.msra.mxu0 0.0
    %985 = vmatpush.msra.mxu0 0.0
    %986 = vmatpush.msra.mxu0 0.0
    %987 = vmatpush.msra.mxu0 0.0
    %988 = vmatpush.msra.mxu0 0.0
    %989 = vmatpush.msra.mxu0 %v122
    %990 = vmatpush.msra.mxu0 %v121
    %991 = vmatpush.msra.mxu0 %v120
    %992 = vmatpush.msra.mxu0 %v119
    %993 = vmatpush.msra.mxu0 %v118
    %994 = vmatpush.msra.mxu0 %v117
    %995 = vmatpush.msra.mxu0 %v116
    %996 = vmatpush.msra.mxu0 %v115
    %997 = vmatmul.f32.gmra.mxu0 %v976
    %v998 = vpop.f32.mrf.mxu0
    %v999 = vadd.f32 %v972, %v998
    %1000 = vmatmul.f32.gmra.mxu0 %v979
    %v1001 = vpop.f32.mrf.mxu0
    %v1002 = vadd.f32 %v972, %v1001
    %1003 = vdwg.mxu0
    %v1004 = vadd.f32 %v919, %v999
    %v1005 = vadd.f32 %v920, %v1002
    %v1006 = vsel %vm188, %v1004, 0.0
    %1007 = vadd.xlane.f32.xlu0 %v1006
    %v1008 = vpop.xlane.xlu0 %1007
    %v1009 = vsel %vm188, %v1005, 0.0
    %1010 = vadd.xlane.f32.xlu0 %v1009
    %v1011 = vpop.xlane.xlu0 %1010
    %v1012 = vmul.f32 %v1008, %v201
    %v1013 = vmul.f32 %v1011, %v201
    %v1014 = vsub.f32 %v1004, %v1012
    %v1015 = vsub.f32 %v1005, %v1013
    %v1016 = vmul.f32 %v1014, %v1014
    %v1017 = vmul.f32 %v1015, %v1015
    %v1018 = vsel %vm188, %v1016, 0.0
    %1019 = vadd.xlane.f32.xlu0 %v1018
    %v1020 = vpop.xlane.xlu0 %1019
    %v1021 = vsel %vm188, %v1017, 0.0
    %1022 = vadd.xlane.f32.xlu0 %v1021
    %v1023 = vpop.xlane.xlu0 %1022
    %v1024 = vmul.f32 %v1020, %v201
    %v1025 = vmul.f32 %v1023, %v201
    %v1026 = vadd.f32 %v1024, 1e-12
    %v1027 = vadd.f32 %v1025, 1e-12
    %v1028 = vrsqrt.pop %v1026
    %v1029 = vmul.f32 %v1028, %v1026
    %v1030 = vmul.f32 %v1029, %v1028
    %v1031 = vmul.f32 0.5, %v1030
    %v1032 = vsub.f32 1.5, %v1031
    %v1033 = vmul.f32 %v1028, %v1032
    %vm1034 = vweird.f32 %v1026
    %vm1035 = vweird.f32 %v1028
    %vm1036 = vmor %vm1034, %vm1035
    %v1037 = vsel %vm1036, %v1028, %v1033
    %v1038 = vrsqrt.pop %v1027
    %v1039 = vmul.f32 %v1038, %v1027
    %v1040 = vmul.f32 %v1039, %v1038
    %v1041 = vmul.f32 0.5, %v1040
    %v1042 = vsub.f32 1.5, %v1041
    %v1043 = vmul.f32 %v1038, %v1042
    %vm1044 = vweird.f32 %v1027
    %vm1045 = vweird.f32 %v1038
    %vm1046 = vmor %vm1044, %vm1045
    %v1047 = vsel %vm1046, %v1038, %v1043
    %v1048 = vmul.f32 %v1014, %v1037
    %v1049 = vmul.f32 %v1015, %v1047
    %v1051 = vperm.slane %v133, 0
    %v1053 = vmul.f32 %v1048, %v1051
    %v1054 = vmul.f32 %v1049, %v1051
    %v1056 = vperm.slane %v135, 0
    %v1058 = vadd.f32 %v1053, %v1056
    %v1059 = vadd.f32 %v1054, %v1056
    %v1061 = vperm.slane %v90, 0
    %v1064 = vsel %vm188, %v1058, 0
    %v1067 = vsel %vm188, %v1059, 0
    %1069 = vmatpush.msra.mxu0 0.0
    %1070 = vmatpush.msra.mxu0 0.0
    %1071 = vmatpush.msra.mxu0 0.0
    %1072 = vmatpush.msra.mxu0 0.0
    %1073 = vmatpush.msra.mxu0 0.0
    %1074 = vmatpush.msra.mxu0 0.0
    %1075 = vmatpush.msra.mxu0 0.0
    %1076 = vmatpush.msra.mxu0 0.0
    %1077 = vmatpush.msra.mxu0 0.0
    %1078 = vmatpush.msra.mxu0 0.0
    %1079 = vmatpush.msra.mxu0 0.0
    %1080 = vmatpush.msra.mxu0 0.0
    %1081 = vmatpush.msra.mxu0 %v88
    %1082 = vmatpush.msra.mxu0 %v87
    %1083 = vmatpush.msra.mxu0 %v86
    %1084 = vmatpush.msra.mxu0 %v85
    %1085 = vmatmul.f32.gmra.mxu0 %v1064
    %v1086 = vpop.f32.mrf.mxu0
    %v1087 = vadd.f32 %v1061, %v1086
    %1088 = vmatmul.f32.gmra.mxu0 %v1067
    %v1089 = vpop.f32.mrf.mxu0
    %v1090 = vadd.f32 %v1061, %v1089
    %1091 = vdwg.mxu0
    %1094 = vrot.lane.b32.xlu0 %v1087, 120
    %v1095 = vpop.permute.xlu0 %1094
    %1096 = vrot.lane.b32.xlu0 %v1090, 120
    %v1097 = vpop.permute.xlu0 %1096
    %1098 = vrot.lane.b32.xlu0 %v1087, 112
    %v1099 = vpop.permute.xlu0 %1098
    %1100 = vrot.lane.b32.xlu0 %v1090, 112
    %v1101 = vpop.permute.xlu0 %1100
    %1102 = vrot.lane.b32.xlu0 %v1087, 104
    %v1103 = vpop.permute.xlu0 %1102
    %1104 = vrot.lane.b32.xlu0 %v1090, 104
    %v1105 = vpop.permute.xlu0 %1104
    %1106 = vrot.lane.b32.xlu0 %v1087, 96
    %v1107 = vpop.permute.xlu0 %1106
    %v1108 = vsel %vm298, %v1087, 0
    %v1110 = vsel %vm298, %v1107, 0
    %1112 = vmatpush.xpose.msra.mxu0 0.0
    %1113 = vmatpush.xpose.msra.mxu0 0.0
    %1114 = vmatpush.xpose.msra.mxu0 0.0
    %1115 = vmatpush.xpose.msra.mxu0 0.0
    %1116 = vmatpush.xpose.msra.mxu0 0.0
    %1117 = vmatpush.xpose.msra.mxu0 0.0
    %1118 = vmatpush.xpose.msra.mxu0 0.0
    %1119 = vmatpush.xpose.msra.mxu0 0.0
    %1120 = vmatpush.xpose.msra.mxu0 0.0
    %1121 = vmatpush.xpose.msra.mxu0 0.0
    %1122 = vmatpush.xpose.msra.mxu0 0.0
    %1123 = vmatpush.xpose.msra.mxu0 0.0
    %1124 = vmatpush.xpose.msra.mxu0 0.0
    %1125 = vmatpush.xpose.msra.mxu0 0.0
    %1126 = vmatpush.xpose.msra.mxu0 0.0
    %1127 = vmatpush.xpose.msra.mxu0 %v1110
    %1128 = vmatmul.f32.gmra.mxu0 %v1108
    %v1129 = vpop.f32.mrf.mxu0
    %v1130 = vadd.f32 0.0, %v1129
    %1131 = vdwg.mxu0
    %1132 = vrot.lane.b32.xlu0 %v1090, 96
    %v1133 = vpop.permute.xlu0 %1132
    %v1134 = vsel %vm298, %v1090, 0
    %v1136 = vsel %vm298, %v1133, 0
    %1138 = vmatpush.xpose.msra.mxu0 0.0
    %1139 = vmatpush.xpose.msra.mxu0 0.0
    %1140 = vmatpush.xpose.msra.mxu0 0.0
    %1141 = vmatpush.xpose.msra.mxu0 0.0
    %1142 = vmatpush.xpose.msra.mxu0 0.0
    %1143 = vmatpush.xpose.msra.mxu0 0.0
    %1144 = vmatpush.xpose.msra.mxu0 0.0
    %1145 = vmatpush.xpose.msra.mxu0 0.0
    %1146 = vmatpush.xpose.msra.mxu0 0.0
    %1147 = vmatpush.xpose.msra.mxu0 0.0
    %1148 = vmatpush.xpose.msra.mxu0 0.0
    %1149 = vmatpush.xpose.msra.mxu0 0.0
    %1150 = vmatpush.xpose.msra.mxu0 0.0
    %1151 = vmatpush.xpose.msra.mxu0 0.0
    %1152 = vmatpush.xpose.msra.mxu0 0.0
    %1153 = vmatpush.xpose.msra.mxu0 %v1136
    %1154 = vmatmul.f32.gmra.mxu0 %v1134
    %v1155 = vpop.f32.mrf.mxu0
    %v1156 = vadd.f32 0.0, %v1155
    %1157 = vdwg.mxu0
    %1158 = vrot.lane.b32.xlu0 %v1095, 96
    %v1159 = vpop.permute.xlu0 %1158
    %v1160 = vsel %vm298, %v1095, 0
    %v1162 = vsel %vm298, %v1159, 0
    %1164 = vmatpush.xpose.msra.mxu0 0.0
    %1165 = vmatpush.xpose.msra.mxu0 0.0
    %1166 = vmatpush.xpose.msra.mxu0 0.0
    %1167 = vmatpush.xpose.msra.mxu0 0.0
    %1168 = vmatpush.xpose.msra.mxu0 0.0
    %1169 = vmatpush.xpose.msra.mxu0 0.0
    %1170 = vmatpush.xpose.msra.mxu0 0.0
    %1171 = vmatpush.xpose.msra.mxu0 0.0
    %1172 = vmatpush.xpose.msra.mxu0 0.0
    %1173 = vmatpush.xpose.msra.mxu0 0.0
    %1174 = vmatpush.xpose.msra.mxu0 0.0
    %1175 = vmatpush.xpose.msra.mxu0 0.0
    %1176 = vmatpush.xpose.msra.mxu0 0.0
    %1177 = vmatpush.xpose.msra.mxu0 0.0
    %1178 = vmatpush.xpose.msra.mxu0 0.0
    %1179 = vmatpush.xpose.msra.mxu0 %v1162
    %1180 = vmatmul.f32.gmra.mxu0 %v1160
    %v1181 = vpop.f32.mrf.mxu0
    %v1182 = vadd.f32 0.0, %v1181
    %1183 = vdwg.mxu0
    %1184 = vrot.lane.b32.xlu0 %v1097, 96
    %v1185 = vpop.permute.xlu0 %1184
    %v1186 = vsel %vm298, %v1097, 0
    %v1188 = vsel %vm298, %v1185, 0
    %1190 = vmatpush.xpose.msra.mxu0 0.0
    %1191 = vmatpush.xpose.msra.mxu0 0.0
    %1192 = vmatpush.xpose.msra.mxu0 0.0
    %1193 = vmatpush.xpose.msra.mxu0 0.0
    %1194 = vmatpush.xpose.msra.mxu0 0.0
    %1195 = vmatpush.xpose.msra.mxu0 0.0
    %1196 = vmatpush.xpose.msra.mxu0 0.0
    %1197 = vmatpush.xpose.msra.mxu0 0.0
    %1198 = vmatpush.xpose.msra.mxu0 0.0
    %1199 = vmatpush.xpose.msra.mxu0 0.0
    %1200 = vmatpush.xpose.msra.mxu0 0.0
    %1201 = vmatpush.xpose.msra.mxu0 0.0
    %1202 = vmatpush.xpose.msra.mxu0 0.0
    %1203 = vmatpush.xpose.msra.mxu0 0.0
    %1204 = vmatpush.xpose.msra.mxu0 0.0
    %1205 = vmatpush.xpose.msra.mxu0 %v1188
    %1206 = vmatmul.f32.gmra.mxu0 %v1186
    %v1207 = vpop.f32.mrf.mxu0
    %v1208 = vadd.f32 0.0, %v1207
    %1209 = vdwg.mxu0
    %1210 = vrot.lane.b32.xlu0 %v1099, 96
    %v1211 = vpop.permute.xlu0 %1210
    %v1212 = vsel %vm298, %v1099, 0
    %v1214 = vsel %vm298, %v1211, 0
    %1216 = vmatpush.xpose.msra.mxu0 0.0
    %1217 = vmatpush.xpose.msra.mxu0 0.0
    %1218 = vmatpush.xpose.msra.mxu0 0.0
    %1219 = vmatpush.xpose.msra.mxu0 0.0
    %1220 = vmatpush.xpose.msra.mxu0 0.0
    %1221 = vmatpush.xpose.msra.mxu0 0.0
    %1222 = vmatpush.xpose.msra.mxu0 0.0
    %1223 = vmatpush.xpose.msra.mxu0 0.0
    %1224 = vmatpush.xpose.msra.mxu0 0.0
    %1225 = vmatpush.xpose.msra.mxu0 0.0
    %1226 = vmatpush.xpose.msra.mxu0 0.0
    %1227 = vmatpush.xpose.msra.mxu0 0.0
    %1228 = vmatpush.xpose.msra.mxu0 0.0
    %1229 = vmatpush.xpose.msra.mxu0 0.0
    %1230 = vmatpush.xpose.msra.mxu0 0.0
    %1231 = vmatpush.xpose.msra.mxu0 %v1214
    %1232 = vmatmul.f32.gmra.mxu0 %v1212
    %v1233 = vpop.f32.mrf.mxu0
    %v1234 = vadd.f32 0.0, %v1233
    %1235 = vdwg.mxu0
    %1236 = vrot.lane.b32.xlu0 %v1101, 96
    %v1237 = vpop.permute.xlu0 %1236
    %v1238 = vsel %vm298, %v1101, 0
    %v1240 = vsel %vm298, %v1237, 0
    %1242 = vmatpush.xpose.msra.mxu0 0.0
    %1243 = vmatpush.xpose.msra.mxu0 0.0
    %1244 = vmatpush.xpose.msra.mxu0 0.0
    %1245 = vmatpush.xpose.msra.mxu0 0.0
    %1246 = vmatpush.xpose.msra.mxu0 0.0
    %1247 = vmatpush.xpose.msra.mxu0 0.0
    %1248 = vmatpush.xpose.msra.mxu0 0.0
    %1249 = vmatpush.xpose.msra.mxu0 0.0
    %1250 = vmatpush.xpose.msra.mxu0 0.0
    %1251 = vmatpush.xpose.msra.mxu0 0.0
    %1252 = vmatpush.xpose.msra.mxu0 0.0
    %1253 = vmatpush.xpose.msra.mxu0 0.0
    %1254 = vmatpush.xpose.msra.mxu0 0.0
    %1255 = vmatpush.xpose.msra.mxu0 0.0
    %1256 = vmatpush.xpose.msra.mxu0 0.0
    %1257 = vmatpush.xpose.msra.mxu0 %v1240
    %1258 = vmatmul.f32.gmra.mxu0 %v1238
    %v1259 = vpop.f32.mrf.mxu0
    %v1260 = vadd.f32 0.0, %v1259
    %1261 = vdwg.mxu0
    %1262 = vrot.lane.b32.xlu0 %v1103, 96
    %v1263 = vpop.permute.xlu0 %1262
    %v1264 = vsel %vm298, %v1103, 0
    %v1266 = vsel %vm298, %v1263, 0
    %1268 = vmatpush.xpose.msra.mxu0 0.0
    %1269 = vmatpush.xpose.msra.mxu0 0.0
    %1270 = vmatpush.xpose.msra.mxu0 0.0
    %1271 = vmatpush.xpose.msra.mxu0 0.0
    %1272 = vmatpush.xpose.msra.mxu0 0.0
    %1273 = vmatpush.xpose.msra.mxu0 0.0
    %1274 = vmatpush.xpose.msra.mxu0 0.0
    %1275 = vmatpush.xpose.msra.mxu0 0.0
    %1276 = vmatpush.xpose.msra.mxu0 0.0
    %1277 = vmatpush.xpose.msra.mxu0 0.0
    %1278 = vmatpush.xpose.msra.mxu0 0.0
    %1279 = vmatpush.xpose.msra.mxu0 0.0
    %1280 = vmatpush.xpose.msra.mxu0 0.0
    %1281 = vmatpush.xpose.msra.mxu0 0.0
    %1282 = vmatpush.xpose.msra.mxu0 0.0
    %1283 = vmatpush.xpose.msra.mxu0 %v1266
    %1284 = vmatmul.f32.gmra.mxu0 %v1264
    %v1285 = vpop.f32.mrf.mxu0
    %v1286 = vadd.f32 0.0, %v1285
    %1287 = vdwg.mxu0
    %1288 = vrot.lane.b32.xlu0 %v1105, 96
    %v1289 = vpop.permute.xlu0 %1288
    %v1290 = vsel %vm298, %v1105, 0
    %v1292 = vsel %vm298, %v1289, 0
    %1294 = vmatpush.xpose.msra.mxu0 0.0
    %1295 = vmatpush.xpose.msra.mxu0 0.0
    %1296 = vmatpush.xpose.msra.mxu0 0.0
    %1297 = vmatpush.xpose.msra.mxu0 0.0
    %1298 = vmatpush.xpose.msra.mxu0 0.0
    %1299 = vmatpush.xpose.msra.mxu0 0.0
    %1300 = vmatpush.xpose.msra.mxu0 0.0
    %1301 = vmatpush.xpose.msra.mxu0 0.0
    %1302 = vmatpush.xpose.msra.mxu0 0.0
    %1303 = vmatpush.xpose.msra.mxu0 0.0
    %1304 = vmatpush.xpose.msra.mxu0 0.0
    %1305 = vmatpush.xpose.msra.mxu0 0.0
    %1306 = vmatpush.xpose.msra.mxu0 0.0
    %1307 = vmatpush.xpose.msra.mxu0 0.0
    %1308 = vmatpush.xpose.msra.mxu0 0.0
    %1309 = vmatpush.xpose.msra.mxu0 %v1292
    %1310 = vmatmul.f32.gmra.mxu0 %v1290
    %v1311 = vpop.f32.mrf.mxu0
    %v1312 = vadd.f32 0.0, %v1311
    %1313 = vdwg.mxu0
    %v1314 = vsel %vm298, %v1130, -inf
    %1315 = vmax.xlane.f32.xlu0 %v1314
    %v1316 = vpop.xlane.xlu0 %1315
    %v1317 = vsel %vm298, %v1156, -inf
    %1318 = vmax.xlane.f32.xlu0 %v1317
    %v1319 = vpop.xlane.xlu0 %1318
    %v1320 = vsel %vm298, %v1182, -inf
    %1321 = vmax.xlane.f32.xlu0 %v1320
    %v1322 = vpop.xlane.xlu0 %1321
    %v1323 = vsel %vm298, %v1208, -inf
    %1324 = vmax.xlane.f32.xlu0 %v1323
    %v1325 = vpop.xlane.xlu0 %1324
    %v1326 = vsel %vm298, %v1234, -inf
    %1327 = vmax.xlane.f32.xlu0 %v1326
    %v1328 = vpop.xlane.xlu0 %1327
    %v1329 = vsel %vm298, %v1260, -inf
    %1330 = vmax.xlane.f32.xlu0 %v1329
    %v1331 = vpop.xlane.xlu0 %1330
    %v1332 = vsel %vm298, %v1286, -inf
    %1333 = vmax.xlane.f32.xlu0 %v1332
    %v1334 = vpop.xlane.xlu0 %1333
    %v1335 = vsel %vm298, %v1312, -inf
    %1336 = vmax.xlane.f32.xlu0 %v1335
    %v1337 = vpop.xlane.xlu0 %1336
    %v1338 = vsub.f32 %v1130, %v1316
    %v1339 = vsub.f32 %v1156, %v1319
    %v1340 = vsub.f32 %v1182, %v1322
    %v1341 = vsub.f32 %v1208, %v1325
    %v1342 = vsub.f32 %v1234, %v1328
    %v1343 = vsub.f32 %v1260, %v1331
    %v1344 = vsub.f32 %v1286, %v1334
    %v1345 = vsub.f32 %v1312, %v1337
    %v1346 = vmul.f32 %v1338, 1.442695
    %v1347 = vpow.pop %v1346
    %v1348 = vmul.f32 %v1339, 1.442695
    %v1349 = vpow.pop %v1348
    %v1350 = vmul.f32 %v1340, 1.442695
    %v1351 = vpow.pop %v1350
    %v1352 = vmul.f32 %v1341, 1.442695
    %v1353 = vpow.pop %v1352
    %v1354 = vmul.f32 %v1342, 1.442695
    %v1355 = vpow.pop %v1354
    %v1356 = vmul.f32 %v1343, 1.442695
    %v1357 = vpow.pop %v1356
    %v1358 = vmul.f32 %v1344, 1.442695
    %v1359 = vpow.pop %v1358
    %v1360 = vmul.f32 %v1345, 1.442695
    %v1361 = vpow.pop %v1360
    %v1362 = vsel %vm298, %v1347, 0.0
    %1363 = vadd.xlane.f32.xlu0 %v1362
    %v1364 = vpop.xlane.xlu0 %1363
    %v1365 = vsel %vm298, %v1349, 0.0
    %1366 = vadd.xlane.f32.xlu0 %v1365
    %v1367 = vpop.xlane.xlu0 %1366
    %v1368 = vsel %vm298, %v1351, 0.0
    %1369 = vadd.xlane.f32.xlu0 %v1368
    %v1370 = vpop.xlane.xlu0 %1369
    %v1371 = vsel %vm298, %v1353, 0.0
    %1372 = vadd.xlane.f32.xlu0 %v1371
    %v1373 = vpop.xlane.xlu0 %1372
    %v1374 = vsel %vm298, %v1355, 0.0
    %1375 = vadd.xlane.f32.xlu0 %v1374
    %v1376 = vpop.xlane.xlu0 %1375
    %v1377 = vsel %vm298, %v1357, 0.0
    %1378 = vadd.xlane.f32.xlu0 %v1377
    %v1379 = vpop.xlane.xlu0 %1378
    %v1380 = vsel %vm298, %v1359, 0.0
    %1381 = vadd.xlane.f32.xlu0 %v1380
    %v1382 = vpop.xlane.xlu0 %1381
    %v1383 = vsel %vm298, %v1361, 0.0
    %1384 = vadd.xlane.f32.xlu0 %v1383
    %v1385 = vpop.xlane.xlu0 %1384
    %v1386 = vrcp.pop %v1364
    %v1387 = vrcp.pop %v1367
    %v1388 = vrcp.pop %v1370
    %v1389 = vrcp.pop %v1373
    %v1390 = vrcp.pop %v1376
    %v1391 = vrcp.pop %v1379
    %v1392 = vrcp.pop %v1382
    %v1393 = vrcp.pop %v1385
    %v1394 = vmul.f32 %v1347, %v1386
    %v1395 = vmul.f32 %v1349, %v1387
    %v1396 = vmul.f32 %v1351, %v1388
    %v1397 = vmul.f32 %v1353, %v1389
    %v1398 = vmul.f32 %v1355, %v1390
    %v1399 = vmul.f32 %v1357, %v1391
    %v1400 = vmul.f32 %v1359, %v1392
    %v1401 = vmul.f32 %v1361, %v1393
    %1402 = vrot.lane.b32.xlu0 %v1087, 64
    %v1403 = vpop.permute.xlu0 %1402
    %v1406 = vsel %vm298, %v1394, 0
    %1408 = vmatpush.msra.mxu0 0.0
    %1409 = vmatpush.msra.mxu0 0.0
    %1410 = vmatpush.msra.mxu0 0.0
    %1411 = vmatpush.msra.mxu0 0.0
    %1412 = vmatpush.msra.mxu0 0.0
    %1413 = vmatpush.msra.mxu0 0.0
    %1414 = vmatpush.msra.mxu0 0.0
    %1415 = vmatpush.msra.mxu0 0.0
    %1416 = vmatpush.msra.mxu0 0.0
    %1417 = vmatpush.msra.mxu0 0.0
    %1418 = vmatpush.msra.mxu0 0.0
    %1419 = vmatpush.msra.mxu0 0.0
    %1420 = vmatpush.msra.mxu0 0.0
    %1421 = vmatpush.msra.mxu0 0.0
    %1422 = vmatpush.msra.mxu0 0.0
    %1423 = vmatpush.msra.mxu0 %v1403
    %1424 = vmatmul.f32.gmra.mxu0 %v1406
    %v1425 = vpop.f32.mrf.mxu0
    %v1426 = vadd.f32 0.0, %v1425
    %1427 = vdwg.mxu0
    %1428 = vrot.lane.b32.xlu0 %v1090, 64
    %v1429 = vpop.permute.xlu0 %1428
    %v1432 = vsel %vm298, %v1395, 0
    %1434 = vmatpush.msra.mxu0 0.0
    %1435 = vmatpush.msra.mxu0 0.0
    %1436 = vmatpush.msra.mxu0 0.0
    %1437 = vmatpush.msra.mxu0 0.0
    %1438 = vmatpush.msra.mxu0 0.0
    %1439 = vmatpush.msra.mxu0 0.0
    %1440 = vmatpush.msra.mxu0 0.0
    %1441 = vmatpush.msra.mxu0 0.0
    %1442 = vmatpush.msra.mxu0 0.0
    %1443 = vmatpush.msra.mxu0 0.0
    %1444 = vmatpush.msra.mxu0 0.0
    %1445 = vmatpush.msra.mxu0 0.0
    %1446 = vmatpush.msra.mxu0 0.0
    %1447 = vmatpush.msra.mxu0 0.0
    %1448 = vmatpush.msra.mxu0 0.0
    %1449 = vmatpush.msra.mxu0 %v1429
    %1450 = vmatmul.f32.gmra.mxu0 %v1432
    %v1451 = vpop.f32.mrf.mxu0
    %v1452 = vadd.f32 0.0, %v1451
    %1453 = vdwg.mxu0
    %1454 = vrot.lane.b32.xlu0 %v1095, 64
    %v1455 = vpop.permute.xlu0 %1454
    %v1458 = vsel %vm298, %v1396, 0
    %1460 = vmatpush.msra.mxu0 0.0
    %1461 = vmatpush.msra.mxu0 0.0
    %1462 = vmatpush.msra.mxu0 0.0
    %1463 = vmatpush.msra.mxu0 0.0
    %1464 = vmatpush.msra.mxu0 0.0
    %1465 = vmatpush.msra.mxu0 0.0
    %1466 = vmatpush.msra.mxu0 0.0
    %1467 = vmatpush.msra.mxu0 0.0
    %1468 = vmatpush.msra.mxu0 0.0
    %1469 = vmatpush.msra.mxu0 0.0
    %1470 = vmatpush.msra.mxu0 0.0
    %1471 = vmatpush.msra.mxu0 0.0
    %1472 = vmatpush.msra.mxu0 0.0
    %1473 = vmatpush.msra.mxu0 0.0
    %1474 = vmatpush.msra.mxu0 0.0
    %1475 = vmatpush.msra.mxu0 %v1455
    %1476 = vmatmul.f32.gmra.mxu0 %v1458
    %v1477 = vpop.f32.mrf.mxu0
    %v1478 = vadd.f32 0.0, %v1477
    %1479 = vdwg.mxu0
    %1480 = vrot.lane.b32.xlu0 %v1097, 64
    %v1481 = vpop.permute.xlu0 %1480
    %v1484 = vsel %vm298, %v1397, 0
    %1486 = vmatpush.msra.mxu0 0.0
    %1487 = vmatpush.msra.mxu0 0.0
    %1488 = vmatpush.msra.mxu0 0.0
    %1489 = vmatpush.msra.mxu0 0.0
    %1490 = vmatpush.msra.mxu0 0.0
    %1491 = vmatpush.msra.mxu0 0.0
    %1492 = vmatpush.msra.mxu0 0.0
    %1493 = vmatpush.msra.mxu0 0.0
    %1494 = vmatpush.msra.mxu0 0.0
    %1495 = vmatpush.msra.mxu0 0.0
    %1496 = vmatpush.msra.mxu0 0.0
    %1497 = vmatpush.msra.mxu0 0.0
    %1498 = vmatpush.msra.mxu0 0.0
    %1499 = vmatpush.msra.mxu0 0.0
    %1500 = vmatpush.msra.mxu0 0.0
    %1501 = vmatpush.msra.mxu0 %v1481
    %1502 = vmatmul.f32.gmra.mxu0 %v1484
    %v1503 = vpop.f32.mrf.mxu0
    %v1504 = vadd.f32 0.0, %v1503
    %1505 = vdwg.mxu0
    %1506 = vrot.lane.b32.xlu0 %v1099, 64
    %v1507 = vpop.permute.xlu0 %1506
    %v1510 = vsel %vm298, %v1398, 0
    %1512 = vmatpush.msra.mxu0 0.0
    %1513 = vmatpush.msra.mxu0 0.0
    %1514 = vmatpush.msra.mxu0 0.0
    %1515 = vmatpush.msra.mxu0 0.0
    %1516 = vmatpush.msra.mxu0 0.0
    %1517 = vmatpush.msra.mxu0 0.0
    %1518 = vmatpush.msra.mxu0 0.0
    %1519 = vmatpush.msra.mxu0 0.0
    %1520 = vmatpush.msra.mxu0 0.0
    %1521 = vmatpush.msra.mxu0 0.0
    %1522 = vmatpush.msra.mxu0 0.0
    %1523 = vmatpush.msra.mxu0 0.0
    %1524 = vmatpush.msra.mxu0 0.0
    %1525 = vmatpush.msra.mxu0 0.0
    %1526 = vmatpush.msra.mxu0 0.0
    %1527 = vmatpush.msra.mxu0 %v1507
    %1528 = vmatmul.f32.gmra.mxu0 %v1510
    %v1529 = vpop.f32.mrf.mxu0
    %v1530 = vadd.f32 0.0, %v1529
    %1531 = vdwg.mxu0
    %1532 = vrot.lane.b32.xlu0 %v1101, 64
    %v1533 = vpop.permute.xlu0 %1532
    %v1536 = vsel %vm298, %v1399, 0
    %1538 = vmatpush.msra.mxu0 0.0
    %1539 = vmatpush.msra.mxu0 0.0
    %1540 = vmatpush.msra.mxu0 0.0
    %1541 = vmatpush.msra.mxu0 0.0
    %1542 = vmatpush.msra.mxu0 0.0
    %1543 = vmatpush.msra.mxu0 0.0
    %1544 = vmatpush.msra.mxu0 0.0
    %1545 = vmatpush.msra.mxu0 0.0
    %1546 = vmatpush.msra.mxu0 0.0
    %1547 = vmatpush.msra.mxu0 0.0
    %1548 = vmatpush.msra.mxu0 0.0
    %1549 = vmatpush.msra.mxu0 0.0
    %1550 = vmatpush.msra.mxu0 0.0
    %1551 = vmatpush.msra.mxu0 0.0
    %1552 = vmatpush.msra.mxu0 0.0
    %1553 = vmatpush.msra.mxu0 %v1533
    %1554 = vmatmul.f32.gmra.mxu0 %v1536
    %v1555 = vpop.f32.mrf.mxu0
    %v1556 = vadd.f32 0.0, %v1555
    %1557 = vdwg.mxu0
    %1558 = vrot.lane.b32.xlu0 %v1103, 64
    %v1559 = vpop.permute.xlu0 %1558
    %v1562 = vsel %vm298, %v1400, 0
    %1564 = vmatpush.msra.mxu0 0.0
    %1565 = vmatpush.msra.mxu0 0.0
    %1566 = vmatpush.msra.mxu0 0.0
    %1567 = vmatpush.msra.mxu0 0.0
    %1568 = vmatpush.msra.mxu0 0.0
    %1569 = vmatpush.msra.mxu0 0.0
    %1570 = vmatpush.msra.mxu0 0.0
    %1571 = vmatpush.msra.mxu0 0.0
    %1572 = vmatpush.msra.mxu0 0.0
    %1573 = vmatpush.msra.mxu0 0.0
    %1574 = vmatpush.msra.mxu0 0.0
    %1575 = vmatpush.msra.mxu0 0.0
    %1576 = vmatpush.msra.mxu0 0.0
    %1577 = vmatpush.msra.mxu0 0.0
    %1578 = vmatpush.msra.mxu0 0.0
    %1579 = vmatpush.msra.mxu0 %v1559
    %1580 = vmatmul.f32.gmra.mxu0 %v1562
    %v1581 = vpop.f32.mrf.mxu0
    %v1582 = vadd.f32 0.0, %v1581
    %1583 = vdwg.mxu0
    %1584 = vrot.lane.b32.xlu0 %v1105, 64
    %v1585 = vpop.permute.xlu0 %1584
    %v1588 = vsel %vm298, %v1401, 0
    %1590 = vmatpush.msra.mxu0 0.0
    %1591 = vmatpush.msra.mxu0 0.0
    %1592 = vmatpush.msra.mxu0 0.0
    %1593 = vmatpush.msra.mxu0 0.0
    %1594 = vmatpush.msra.mxu0 0.0
    %1595 = vmatpush.msra.mxu0 0.0
    %1596 = vmatpush.msra.mxu0 0.0
    %1597 = vmatpush.msra.mxu0 0.0
    %1598 = vmatpush.msra.mxu0 0.0
    %1599 = vmatpush.msra.mxu0 0.0
    %1600 = vmatpush.msra.mxu0 0.0
    %1601 = vmatpush.msra.mxu0 0.0
    %1602 = vmatpush.msra.mxu0 0.0
    %1603 = vmatpush.msra.mxu0 0.0
    %1604 = vmatpush.msra.mxu0 0.0
    %1605 = vmatpush.msra.mxu0 %v1585
    %1606 = vmatmul.f32.gmra.mxu0 %v1588
    %v1607 = vpop.f32.mrf.mxu0
    %v1608 = vadd.f32 0.0, %v1607
    %1609 = vdwg.mxu0
    %1612 = vrot.lane.b32.xlu0 %v1478, 8
    %v1613 = vpop.permute.xlu0 %1612
    %1614 = vrot.lane.b32.xlu0 %v1504, 8
    %v1615 = vpop.permute.xlu0 %1614
    %1620 = vrot.lane.b32.xlu0 %v1530, 16
    %v1621 = vpop.permute.xlu0 %1620
    %1622 = vrot.lane.b32.xlu0 %v1556, 16
    %v1623 = vpop.permute.xlu0 %1622
    %1628 = vrot.lane.b32.xlu0 %v1582, 24
    %v1629 = vpop.permute.xlu0 %1628
    %1630 = vrot.lane.b32.xlu0 %v1608, 24
    %v1631 = vpop.permute.xlu0 %1630
    %v1634 = vsel %vm298, %v1426, %v1613
    %v1635 = vsel %vm298, %v1452, %v1615
    %v1636 = vsel %vm827, %v1634, %v1621
    %v1637 = vsel %vm827, %v1635, %v1623
    %v1638 = vsel %vm830, %v1636, %v1629
    %v1639 = vsel %vm830, %v1637, %v1631
    %v1641 = vperm.slane %v100, 0
    %v1644 = vsel %vm188, %v1638, 0
    %v1647 = vsel %vm188, %v1639, 0
    %1649 = vmatpush.msra.mxu0 0.0
    %1650 = vmatpush.msra.mxu0 0.0
    %1651 = vmatpush.msra.mxu0 0.0
    %1652 = vmatpush.msra.mxu0 0.0
    %1653 = vmatpush.msra.mxu0 0.0
    %1654 = vmatpush.msra.mxu0 0.0
    %1655 = vmatpush.msra.mxu0 0.0
    %1656 = vmatpush.msra.mxu0 0.0
    %1657 = vmatpush.msra.mxu0 0.0
    %1658 = vmatpush.msra.mxu0 0.0
    %1659 = vmatpush.msra.mxu0 0.0
    %1660 = vmatpush.msra.mxu0 0.0
    %1661 = vmatpush.msra.mxu0 %v98
    %1662 = vmatpush.msra.mxu0 %v97
    %1663 = vmatpush.msra.mxu0 %v96
    %1664 = vmatpush.msra.mxu0 %v95
    %1665 = vmatmul.f32.gmra.mxu0 %v1644
    %v1666 = vpop.f32.mrf.mxu0
    %v1667 = vadd.f32 %v1641, %v1666
    %1668 = vmatmul.f32.gmra.mxu0 %v1647
    %v1669 = vpop.f32.mrf.mxu0
    %v1670 = vadd.f32 %v1641, %v1669
    %1671 = vdwg.mxu0
    %v1672 = vadd.f32 %v1058, %v1667
    %v1673 = vadd.f32 %v1059, %v1670
    %v1674 = vsel %vm188, %v1672, 0.0
    %1675 = vadd.xlane.f32.xlu0 %v1674
    %v1676 = vpop.xlane.xlu0 %1675
    %v1677 = vsel %vm188, %v1673, 0.0
    %1678 = vadd.xlane.f32.xlu0 %v1677
    %v1679 = vpop.xlane.xlu0 %1678
    %v1680 = vmul.f32 %v1676, %v201
    %v1681 = vmul.f32 %v1679, %v201
    %v1682 = vsub.f32 %v1672, %v1680
    %v1683 = vsub.f32 %v1673, %v1681
    %v1684 = vmul.f32 %v1682, %v1682
    %v1685 = vmul.f32 %v1683, %v1683
    %v1686 = vsel %vm188, %v1684, 0.0
    %1687 = vadd.xlane.f32.xlu0 %v1686
    %v1688 = vpop.xlane.xlu0 %1687
    %v1689 = vsel %vm188, %v1685, 0.0
    %1690 = vadd.xlane.f32.xlu0 %v1689
    %v1691 = vpop.xlane.xlu0 %1690
    %v1692 = vmul.f32 %v1688, %v201
    %v1693 = vmul.f32 %v1691, %v201
    %v1694 = vadd.f32 %v1692, 1e-12
    %v1695 = vadd.f32 %v1693, 1e-12
    %v1696 = vrsqrt.pop %v1694
    %v1697 = vmul.f32 %v1696, %v1694
    %v1698 = vmul.f32 %v1697, %v1696
    %v1699 = vmul.f32 0.5, %v1698
    %v1700 = vsub.f32 1.5, %v1699
    %v1701 = vmul.f32 %v1696, %v1700
    %vm1702 = vweird.f32 %v1694
    %vm1703 = vweird.f32 %v1696
    %vm1704 = vmor %vm1702, %vm1703
    %v1705 = vsel %vm1704, %v1696, %v1701
    %v1706 = vrsqrt.pop %v1695
    %v1707 = vmul.f32 %v1706, %v1695
    %v1708 = vmul.f32 %v1707, %v1706
    %v1709 = vmul.f32 0.5, %v1708
    %v1710 = vsub.f32 1.5, %v1709
    %v1711 = vmul.f32 %v1706, %v1710
    %vm1712 = vweird.f32 %v1695
    %vm1713 = vweird.f32 %v1706
    %vm1714 = vmor %vm1712, %vm1713
    %v1715 = vsel %vm1714, %v1706, %v1711
    %v1716 = vmul.f32 %v1682, %v1705
    %v1717 = vmul.f32 %v1683, %v1715
    %v1719 = vperm.slane %v102, 0
    %v1721 = vmul.f32 %v1716, %v1719
    %v1722 = vmul.f32 %v1717, %v1719
    %v1724 = vperm.slane %v104, 0
    %v1726 = vadd.f32 %v1721, %v1724
    %v1727 = vadd.f32 %v1722, %v1724
    %v1729 = vperm.slane %v114, 0
    %v1732 = vsel %vm188, %v1726, 0
    %v1735 = vsel %vm188, %v1727, 0
    %1737 = vmatpush.msra.mxu0 0.0
    %1738 = vmatpush.msra.mxu0 0.0
    %1739 = vmatpush.msra.mxu0 0.0
    %1740 = vmatpush.msra.mxu0 0.0
    %1741 = vmatpush.msra.mxu0 0.0
    %1742 = vmatpush.msra.mxu0 0.0
    %1743 = vmatpush.msra.mxu0 0.0
    %1744 = vmatpush.msra.mxu0 0.0
    %1745 = vmatpush.msra.mxu0 0.0
    %1746 = vmatpush.msra.mxu0 0.0
    %1747 = vmatpush.msra.mxu0 0.0
    %1748 = vmatpush.msra.mxu0 0.0
    %1749 = vmatpush.msra.mxu0 %v112
    %1750 = vmatpush.msra.mxu0 %v111
    %1751 = vmatpush.msra.mxu0 %v110
    %1752 = vmatpush.msra.mxu0 %v109
    %1753 = vmatmul.f32.gmra.mxu0 %v1732
    %v1754 = vpop.f32.mrf.mxu0
    %v1755 = vadd.f32 %v1729, %v1754
    %1756 = vmatmul.f32.gmra.mxu0 %v1735
    %v1757 = vpop.f32.mrf.mxu0
    %v1758 = vadd.f32 %v1729, %v1757
    %1759 = vdwg.mxu0
    %v1760 = vmul.f32 %v1755, 0.5
    %v1761 = vmul.f32 %v1758, 0.5
    %v1762 = vmul.f32 %v1755, 0.044715
    %v1763 = vmul.f32 %v1758, 0.044715
    %v1764 = vmul.f32 %v1762, %v1755
    %v1765 = vmul.f32 %v1763, %v1758
    %v1766 = vmul.f32 %v1764, %v1755
    %v1767 = vmul.f32 %v1765, %v1758
    %v1768 = vadd.f32 %v1755, %v1766
    %v1769 = vadd.f32 %v1758, %v1767
    %v1770 = vmul.f32 %v1768, 0.7978846
    %v1771 = vmul.f32 %v1769, 0.7978846
    %v1772 = vtanh.pop %v1770
    %v1773 = vtanh.pop %v1771
    %v1774 = vadd.f32 %v1772, 1.0
    %v1775 = vadd.f32 %v1773, 1.0
    %v1776 = vmul.f32 %v1760, %v1774
    %v1777 = vmul.f32 %v1761, %v1775
    %v1779 = vperm.slane %v132, 0
    %v1782 = vsel %vm974, %v1776, 0
    %v1785 = vsel %vm974, %v1777, 0
    %1787 = vmatpush.msra.mxu0 0.0
    %1788 = vmatpush.msra.mxu0 0.0
    %1789 = vmatpush.msra.mxu0 0.0
    %1790 = vmatpush.msra.mxu0 0.0
    %1791 = vmatpush.msra.mxu0 0.0
    %1792 = vmatpush.msra.mxu0 0.0
    %1793 = vmatpush.msra.mxu0 0.0
    %1794 = vmatpush.msra.mxu0 0.0
    %1795 = vmatpush.msra.mxu0 %v130
    %1796 = vmatpush.msra.mxu0 %v129
    %1797 = vmatpush.msra.mxu0 %v128
    %1798 = vmatpush.msra.mxu0 %v127
    %1799 = vmatpush.msra.mxu0 %v126
    %1800 = vmatpush.msra.mxu0 %v125
    %1801 = vmatpush.msra.mxu0 %v124
    %1802 = vmatpush.msra.mxu0 %v123
    %1803 = vmatmul.f32.gmra.mxu0 %v1782
    %v1804 = vpop.f32.mrf.mxu0
    %v1805 = vadd.f32 %v1779, %v1804
    %1806 = vmatmul.f32.gmra.mxu0 %v1785
    %v1807 = vpop.f32.mrf.mxu0
    %v1808 = vadd.f32 %v1779, %v1807
    %1809 = vdwg.mxu0
    %v1810 = vadd.f32 %v1726, %v1805
    %v1811 = vadd.f32 %v1727, %v1808
    %v1812 = vsel %vm188, %v1810, 0.0
    %1813 = vadd.xlane.f32.xlu0 %v1812
    %v1814 = vpop.xlane.xlu0 %1813
    %v1815 = vsel %vm188, %v1811, 0.0
    %1816 = vadd.xlane.f32.xlu0 %v1815
    %v1817 = vpop.xlane.xlu0 %1816
    %v1818 = vmul.f32 %v1814, %v201
    %v1819 = vmul.f32 %v1817, %v201
    %v1820 = vsub.f32 %v1810, %v1818
    %v1821 = vsub.f32 %v1811, %v1819
    %v1822 = vmul.f32 %v1820, %v1820
    %v1823 = vmul.f32 %v1821, %v1821
    %v1824 = vsel %vm188, %v1822, 0.0
    %1825 = vadd.xlane.f32.xlu0 %v1824
    %v1826 = vpop.xlane.xlu0 %1825
    %v1827 = vsel %vm188, %v1823, 0.0
    %1828 = vadd.xlane.f32.xlu0 %v1827
    %v1829 = vpop.xlane.xlu0 %1828
    %v1830 = vmul.f32 %v1826, %v201
    %v1831 = vmul.f32 %v1829, %v201
    %v1832 = vadd.f32 %v1830, 1e-12
    %v1833 = vadd.f32 %v1831, 1e-12
    %v1834 = vrsqrt.pop %v1832
    %v1835 = vmul.f32 %v1834, %v1832
    %v1836 = vmul.f32 %v1835, %v1834
    %v1837 = vmul.f32 0.5, %v1836
    %v1838 = vsub.f32 1.5, %v1837
    %v1839 = vmul.f32 %v1834, %v1838
    %vm1840 = vweird.f32 %v1832
    %vm1841 = vweird.f32 %v1834
    %vm1842 = vmor %vm1840, %vm1841
    %v1843 = vsel %vm1842, %v1834, %v1839
    %v1844 = vrsqrt.pop %v1833
    %v1845 = vmul.f32 %v1844, %v1833
    %v1846 = vmul.f32 %v1845, %v1844
    %v1847 = vmul.f32 0.5, %v1846
    %v1848 = vsub.f32 1.5, %v1847
    %v1849 = vmul.f32 %v1844, %v1848
    %vm1850 = vweird.f32 %v1833
    %vm1851 = vweird.f32 %v1844
    %vm1852 = vmor %vm1850, %vm1851
    %v1853 = vsel %vm1852, %v1844, %v1849
    %v1854 = vmul.f32 %v1820, %v1843
    %v1855 = vmul.f32 %v1821, %v1853
    %v1857 = vperm.slane %v134, 0
    %v1859 = vmul.f32 %v1854, %v1857
    %v1860 = vmul.f32 %v1855, %v1857
    %v1862 = vperm.slane %v136, 0
    %v1864 = vadd.f32 %v1859, %v1862
    %v1865 = vadd.f32 %v1860, %v1862
    %v1866 = vlaneseq
    %v1867 = vshrl.u32 %v1866, 7
    %v1869 = vsel %vm188, %v1864, 0
    %v1872 = vsel %vm188, %v1865, 0
    %1874 = vmatpush.msra.mxu0 0.0
    %1875 = vmatpush.msra.mxu0 0.0
    %1876 = vmatpush.msra.mxu0 0.0
    %1877 = vmatpush.msra.mxu0 0.0
    %1878 = vmatpush.msra.mxu0 0.0
    %1879 = vmatpush.msra.mxu0 0.0
    %1880 = vmatpush.msra.mxu0 0.0
    %1881 = vmatpush.msra.mxu0 0.0
    %1882 = vmatpush.msra.mxu0 0.0
    %1883 = vmatpush.msra.mxu0 0.0
    %1884 = vmatpush.msra.mxu0 0.0
    %1885 = vmatpush.msra.mxu0 0.0
    %1886 = vmatpush.msra.mxu0 %v140
    %1887 = vmatpush.msra.mxu0 %v139
    %1888 = vmatpush.msra.mxu0 %v138
    %1889 = vmatpush.msra.mxu0 %v137
    %1890 = vmatmul.f32.gmra.mxu0 %v1869
    %v1891 = vpop.f32.mrf.mxu0
    %v1892 = vadd.f32 0.0, %v1891
    %1893 = vmatmul.f32.gmra.mxu0 %v1872
    %v1894 = vpop.f32.mrf.mxu0
    %v1895 = vadd.f32 0.0, %v1894
    %1896 = vdwg.mxu0
    %v1897 = vrot.slane %v1892, 7
    %v1898 = vrot.slane %v1895, 7
    %vm1899 = vcmp.lt.s32.totalorder %v1867, 1
    %v1900 = vsel %vm1899, %v1897, %v1898
    %v1901 = vsel %vm1899, %v1898, %v1897
    %v1902 = vadd.s32 %v1867, 4294967295
    %vm1903 = vcmp.ge.s32.totalorder %v1902, 0
    %vm1904 = vcmp.lt.s32.totalorder %v1902, 8
    %vm1905 = vmand %vm1903, %vm1904
    %v1906 = vsel %vm1905, %v1901, 0.0
    %v1907 = vsel %vm1905, %v1900, 0.0
    %v1908 = vadd.f32 %v1906, 0.0
    %v1909 = vadd.f32 %v1907, 0.0
    %1910 = vmatpush.msra.mxu0 0.0
    %1911 = vmatpush.msra.mxu0 0.0
    %1912 = vmatpush.msra.mxu0 0.0
    %1913 = vmatpush.msra.mxu0 0.0
    %1914 = vmatpush.msra.mxu0 0.0
    %1915 = vmatpush.msra.mxu0 0.0
    %1916 = vmatpush.msra.mxu0 0.0
    %1917 = vmatpush.msra.mxu0 0.0
    %1918 = vmatpush.msra.mxu0 0.0
    %1919 = vmatpush.msra.mxu0 0.0
    %1920 = vmatpush.msra.mxu0 0.0
    %1921 = vmatpush.msra.mxu0 0.0
    %1922 = vmatpush.msra.mxu0 %v144
    %1923 = vmatpush.msra.mxu0 %v143
    %1924 = vmatpush.msra.mxu0 %v142
    %1925 = vmatpush.msra.mxu0 %v141
    %1926 = vmatmul.f32.gmra.mxu0 %v1869
    %v1927 = vpop.f32.mrf.mxu0
    %v1928 = vadd.f32 0.0, %v1927
    %1929 = vmatmul.f32.gmra.mxu0 %v1872
    %v1930 = vpop.f32.mrf.mxu0
    %v1931 = vadd.f32 0.0, %v1930
    %1932 = vdwg.mxu0
    %v1933 = vadd.f32 %v1908, %v1928
    %v1934 = vadd.f32 %v1909, %v1931
    %1935 = vmatpush.msra.mxu0 0.0
    %1936 = vmatpush.msra.mxu0 0.0
    %1937 = vmatpush.msra.mxu0 0.0
    %1938 = vmatpush.msra.mxu0 0.0
    %1939 = vmatpush.msra.mxu0 0.0
    %1940 = vmatpush.msra.mxu0 0.0
    %1941 = vmatpush.msra.mxu0 0.0
    %1942 = vmatpush.msra.mxu0 0.0
    %1943 = vmatpush.msra.mxu0 0.0
    %1944 = vmatpush.msra.mxu0 0.0
    %1945 = vmatpush.msra.mxu0 0.0
    %1946 = vmatpush.msra.mxu0 0.0
    %1947 = vmatpush.msra.mxu0 %v148
    %1948 = vmatpush.msra.mxu0 %v147
    %1949 = vmatpush.msra.mxu0 %v146
    %1950 = vmatpush.msra.mxu0 %v145
    %1951 = vmatmul.f32.gmra.mxu0 %v1869
    %v1952 = vpop.f32.mrf.mxu0
    %v1953 = vadd.f32 0.0, %v1952
    %1954 = vmatmul.f32.gmra.mxu0 %v1872
    %v1955 = vpop.f32.mrf.mxu0
    %v1956 = vadd.f32 0.0, %v1955
    %1957 = vdwg.mxu0
    %v1958 = vrot.slane %v1953, 1
    %v1959 = vrot.slane %v1956, 1
    %vm1960 = vcmp.lt.s32.totalorder %v1867, 7
    %v1961 = vsel %vm1960, %v1958, %v1959
    %v1962 = vsel %vm1960, %v1959, %v1958
    %v1963 = vadd.s32 %v1867, 1
    %vm1964 = vcmp.ge.s32.totalorder %v1963, 0
    %vm1965 = vcmp.lt.s32.totalorder %v1963, 8
    %vm1966 = vmand %vm1964, %vm1965
    %v1967 = vsel %vm1966, %v1961, 0.0
    %v1968 = vsel %vm1966, %v1962, 0.0
    %v1969 = vadd.f32 %v1933, %v1967
    %v1970 = vadd.f32 %v1934, %v1968
    %1971 = vst.msk [vmem:[#allocation2] sm:$0xff] %vm188, %v1969
    %1972 = vst.msk [vmem:[#allocation2 + $0x8] sm:$0xff] %vm188, %v1970
    // Predicated region
    $region74: #{bert_cnn_forward.1} parent=1 // pred_check
      _
    $region75: #{bert_cnn_forward.1} parent=1 // pred_check_branch
      %1974 = sbr.rel (0) target = $region77
    $region76: #{bert_cnn_forward.1} parent=1 // pred_region
      %1976 = vsyncadd [#allocation3], 0
      %s1977 = sshll.u32 [#allocation2], 4
      %s1978 = int_to_ptr.vmem [resolvable:$true] %s1977
      %s1979 = sshll.u32 %s18, 4
      %s1980 = int_to_ptr.hbm [resolvable:$true] %s1979
      %1985 = dma.vmem_to_hbm [thread:$0]  %s1978, 256, %s1980, [#allocation3], 128, 128, 8
    $region77: #{bert_cnn_forward.1} parent=1 // pred_fallthru
      _
    // Predicated region
    $region78: #{bert_cnn_forward.1} parent=1 // pred_check
      _
    $region79: #{bert_cnn_forward.1} parent=1 // pred_check_branch
      %1987 = sbr.rel (0) target = $region81
    $region80: #{bert_cnn_forward.1} parent=1 // pred_region
      %1989 = dma.done [#allocation3], 256
    $region81: #{bert_cnn_forward.1} parent=1 // pred_fallthru
      _
    %1990 = vsyncpa [#allocation3], 1

</llo_original>
